<compile_context>
chip_gen: v7x
topology: tpu7x:2x2x1
jax: 0.10.0
libtpu: 0.0.40
codegen_flags: <defaults>
</compile_context>

<pallas_src>
import functools

import jax
import jax.numpy as jnp
import numpy as np
from jax.experimental import pallas as pl
from jax.experimental.pallas import tpu as pltpu

_LANE = 128  # TPU lane width; all packed / padded minor dims are multiples of this.


# ------------------------------ fused kernel --------------------------------

def _fused_cnn_kernel(x_ref, m1_ref, m2_ref, fw1_ref, fw2_ref, fw3_ref, c_ref,
                      out_ref, z1_scr, p1_scr, z2_scr):
    f32 = jnp.float32
    bf16 = jnp.bfloat16

    K = m1_ref.shape[0]               # vertical conv taps (3)
    n1 = x_ref.shape[1]               # Bt * 32 rows in this block (stage 1)
    n2 = n1 // 2                      # Bt * 16 rows (pooled-1 rows, padded per image)
    bt = out_ref.shape[0]             # images per block
    rows2 = n2 // bt                  # pooled-1 rows stored per image (16)
    half1 = m1_ref.shape[2] // 2      # 128 packed lanes per pool parity (stage 1)
    half2 = m2_ref.shape[2] // 2      # 128 packed lanes per pool parity (stage 2)
    nfc = fw1_ref.shape[0]            # pooled-2 rows feeding fc1 (6)

    sh1 = c_ref[0:1, :]                       # folded conv1 bias + BN shift
    sh2 = c_ref[1:2, :]                       # folded conv2 bias + BN shift
    fb1 = c_ref[2:3, 0:half1]
    fb2 = c_ref[2:3, half1:2 * half1]
    fb3 = c_ref[3:4, 0:half1]

    # ---- stage 1: conv1 (+bias+BN folded); taps were pre-shifted on the host ----
    acc = jnp.dot(x_ref[0], m1_ref[0], preferred_element_type=f32)
    for kh in range(1, K):
        acc = acc + jnp.dot(x_ref[kh], m1_ref[kh], preferred_element_type=f32)
    acc = acc + sh1
    z1_scr[...] = jnp.maximum(acc[:, :half1], acc[:, half1:])        # 2x1 pool along W

    # 1x2 pool along H + ReLU via stride-2 even/odd row reads of the scratch.
    p1 = jnp.maximum(jnp.maximum(z1_scr[pl.ds(0, n2, 2), :],
                                 z1_scr[pl.ds(1, n2, 2), :]), 0.0)
    p1_scr[pl.ds(0, n2), :] = p1
    p1_scr[pl.ds(n2, 8), :] = jnp.zeros((8, half1), f32)   # pad rows read by shifted taps

    # ---- stage 2: conv2 (+bias+BN folded); taps are offset reads of p1 scratch ----
    acc = jnp.dot(p1_scr[pl.ds(0, n2), :].astype(bf16), m2_ref[0],
                  preferred_element_type=f32)
    for kh in range(1, K):
        acc = acc + jnp.dot(p1_scr[pl.ds(kh, n2), :].astype(bf16), m2_ref[kh],
                            preferred_element_type=f32)
    acc = acc + sh2
    z2_scr[...] = jnp.maximum(acc[:, :half2], acc[:, half2:])        # 2x1 pool along W

    # ---- 1x2 H-pool + ReLU fused with fc1 (per-image row reads, stride = rows2) ----
    h = jnp.zeros((bt, half1), f32)
    for r in range(nfc):
        ze = z2_scr[pl.ds(2 * r, bt, rows2), :]
        zo = z2_scr[pl.ds(2 * r + 1, bt, rows2), :]
        p2r = jnp.maximum(jnp.maximum(ze, zo), 0.0).astype(bf16)     # pooled row r, all imgs
        h = h + jnp.dot(p2r, fw1_ref[r], preferred_element_type=f32)

    # ---- MLP tail: fc1 bias/ReLU -> fc2 -> ReLU -> fc3 (all (Bt,128)@(128,128)) ----
    h = jnp.maximum(h + fb1, 0.0).astype(bf16)
    h = jnp.maximum(jnp.dot(h, fw2_ref[...], preferred_element_type=f32) + fb2, 0.0)
    out_ref[...] = jnp.dot(h.astype(bf16), fw3_ref[...],
                           preferred_element_type=f32) + fb3


# ----------------------- host-side parameter packing ------------------------

def prepare_params(p, in_hw, eps=1e-5):
    """One-time repack of torch-style params into kernel-ready bf16 matrices.

    Folds conv bias + eval-mode BatchNorm into block-Toeplitz conv matrices whose
    output columns are packed (parity, x, cout) and zero padded to 2x128 lanes,
    permutes fc1 rows to the kernel's packed (h, w, c) flatten order, pads all FC
    dims to 128 lanes, and packs the BN shifts / fc biases into one f32 array.
    """
    K = p["w1"].shape[0]
    cin1 = p["w1"].shape[2]

    def bn_fold(bias, g, b, m, v):
        scale = np.asarray(g, np.float32) / np.sqrt(np.asarray(v, np.float32) + eps)
        shift = (np.asarray(b, np.float32)
                 + (np.asarray(bias, np.float32) - np.asarray(m, np.float32)) * scale)
        return scale, shift

    def conv_stage(w_hwio, scale, shift, hw_in, in_cols, half):
        Kk, _, cin, cout = w_hwio.shape
        ohw = hw_in - Kk + 1           # conv output height == width (square input)
        phw = ohw // 2                 # pooled height == width (floor, like MaxPool2d)
        assert phw * cout <= half and hw_in * cin <= in_cols
        ws = np.asarray(w_hwio, np.float32) * scale[None, None, None, :]
        M = np.zeros((Kk, in_cols, 2 * half), np.float32)
        sh = np.zeros((2 * half,), np.float32)
        for wp in range(2 * phw):      # conv output x positions we actually keep
            q, r = wp // 2, wp % 2
            col0 = r * half + q * cout
            sh[col0:col0 + cout] = shift
            for kw in range(Kk):
                row0 = (wp + kw) * cin
                M[:, row0:row0 + cin, col0:col0 + cout] = ws[:, kw]
        return M, sh, phw

    scale1, shift1 = bn_fold(p["b1"], p["bn1_g"], p["bn1_b"], p["bn1_m"], p["bn1_v"])
    m1, sh1, ph1 = conv_stage(p["w1"], scale1, shift1, in_hw, in_hw * cin1, _LANE)

    scale2, shift2 = bn_fold(p["b2"], p["bn2_g"], p["bn2_b"], p["bn2_m"], p["bn2_v"])
    c2 = p["w2"].shape[3]
    m2, sh2, ph2 = conv_stage(p["w2"], scale2, shift2, ph1, _LANE, _LANE)

    # fc1: permute rows from torch flatten order (c, h, w) to the kernel's packed
    # (h, w*c2 + c) order; one zero-padded (128, 128) block per pooled row h.
    fw1 = np.asarray(p["fw1"], np.float32)
    d1 = fw1.shape[1]
    assert fw1.shape[0] == c2 * ph2 * ph2, "fc1 expects a 32x32 input spatial size"
    fw1 = fw1.reshape(c2, ph2, ph2, d1).transpose(1, 2, 0, 3)        # -> (h, w, c, d1)
    fw1p = np.zeros((ph2, _LANE, _LANE), np.float32)
    fw1p[:, :ph2 * c2, :d1] = fw1.reshape(ph2, ph2 * c2, d1)

    fw2 = np.asarray(p["fw2"], np.float32)
    fw3 = np.asarray(p["fw3"], np.float32)
    d2, nc = fw2.shape[1], fw3.shape[1]
    assert d1 <= _LANE and d2 <= _LANE and nc <= _LANE
    fw2p = np.zeros((_LANE, _LANE), np.float32); fw2p[:d1, :d2] = fw2
    fw3p = np.zeros((_LANE, _LANE), np.float32); fw3p[:d2, :nc] = fw3

    # Packed constants (kept f32): row0 = sh1, row1 = sh2, row2 = [fb1 | fb2],
    # row3 = [fb3 | 0].
    consts = np.zeros((4, 2 * _LANE), np.float32)
    consts[0] = sh1
    consts[1] = sh2
    consts[2, :d1] = np.asarray(p["fb1"], np.float32)
    consts[2, _LANE:_LANE + d2] = np.asarray(p["fb2"], np.float32)
    consts[3, :nc] = np.asarray(p["fb3"], np.float32)

    bf = jnp.bfloat16
    return dict(m1=jnp.asarray(m1, bf), m2=jnp.asarray(m2, bf),
                fw1=jnp.asarray(fw1p, bf), fw2=jnp.asarray(fw2p, bf),
                fw3=jnp.asarray(fw3p, bf), consts=jnp.asarray(consts, jnp.float32))


# ------------------------------ forward pass --------------------------------

def basic_cnn_forward(x_nchw, kp, *, num_classes, block_batch=64):
    """Eval-mode forward of `basic_CNN` as a single fused Pallas TPU kernel."""
    B, C, H, W = x_nchw.shape
    K, WC, c1cols = kp["m1"].shape
    assert WC == W * C, "input must match the prepared params"

    bt = max(1, min(block_batch, B))            # images per grid step
    nblk = pl.cdiv(B, bt)
    Bp = nblk * bt

    # NCHW -> NHWC -> per-row packed (w*C + c) layout; pad batch to a tile multiple.
    xp = jnp.transpose(x_nchw, (0, 2, 3, 1)).astype(jnp.float32).reshape(B, H, WC)
    if Bp != B:
        xp = jnp.pad(xp, ((0, Bp - B), (0, 0), (0, 0)))
    # Host-side vertical-tap unfold: tap k holds rows shifted up by k (zero past bottom),
    # so every stage-1 tap matmul is a single dense (Bt*H, WC) @ (WC, 256) contraction.
    x_taps = jnp.stack(
        [jnp.pad(xp[:, k:, :], ((0, 0), (0, k), (0, 0))) for k in range(K)], axis=0)
    x_taps = x_taps.reshape(K, Bp * H, WC).astype(jnp.bfloat16)

    weights = (kp["m1"], kp["m2"], kp["fw1"], kp["fw2"], kp["fw3"], kp["consts"])

    def const_spec(arr):
        zeros = (0,) * arr.ndim
        return pl.BlockSpec(arr.shape, lambda b, z=zeros: z)

    ncpad = kp["fw3"].shape[1]
    m2_rows, m2_cols = kp["m2"].shape[1], kp["m2"].shape[2]
    flops = 2 * Bp * (K * H * WC * c1cols
                      + K * (H // 2) * m2_rows * m2_cols
                      + (kp["fw1"].shape[0] + 2) * _LANE * _LANE)
    bytes_accessed = (x_taps.size * 2
                      + sum(int(np.prod(w.shape)) * w.dtype.itemsize for w in weights)
                      + Bp * ncpad * 4)

    out = pl.pallas_call(
        _fused_cnn_kernel,
        out_shape=jax.ShapeDtypeStruct((Bp, ncpad), jnp.float32),
        grid=(nblk,),
        in_specs=[pl.BlockSpec((K, bt * H, WC), lambda b: (0, b, 0))]
                 + [const_spec(w) for w in weights],
        out_specs=pl.BlockSpec((bt, ncpad), lambda b: (b, 0)),
        scratch_shapes=[pltpu.VMEM((bt * H, _LANE), jnp.float32),          # W-pooled conv1
                        pltpu.VMEM((bt * (H // 2) + 8, _LANE), jnp.float32),  # pooled-1 (+pad)
                        pltpu.VMEM((bt * (H // 2), _LANE), jnp.float32)],  # W-pooled conv2
        compiler_params=pltpu.CompilerParams(
            dimension_semantics=("parallel",),
            vmem_limit_bytes=32 * 1024 * 1024),
        cost_estimate=pl.CostEstimate(flops=flops, transcendentals=0,
                                      bytes_accessed=bytes_accessed),
    )(x_taps, *weights)
    return out[:B, :num_classes]


# --------------------------- plain-JAX reference ----------------------------

def _reference_forward(x_nchw, p, eps=1e-5):
    """Plain-JAX (XLA) reference of the PyTorch eval-mode forward, for checking."""
    x = jnp.transpose(x_nchw, (0, 2, 3, 1)).astype(jnp.float32)

    def conv_bn(x, w, b, g, beta, m, v):
        k = w.shape[0]
        B, H, W, C = x.shape
        oh, ow = H - k + 1, W - k + 1
        taps = [x[:, i:i + oh, j:j + ow, :] for i in range(k) for j in range(k)]
        patches = jnp.stack(taps, axis=3).reshape(B * oh * ow, k * k * C)
        y = patches @ w.reshape(-1, w.shape[-1]) + b
        scale = g / jnp.sqrt(v + eps)
        y = y * scale + (beta - m * scale)
        return y.reshape(B, oh, ow, -1)

    def pool_relu(x):
        B, H, W, C = x.shape
        ph, pw = H // 2, W // 2
        x = x[:, :2 * ph, :2 * pw, :].reshape(B, ph, 2, pw, 2, C).max(axis=(2, 4))
        return jnp.maximum(x, 0.0)

    x = pool_relu(conv_bn(x, p["w1"], p["b1"], p["bn1_g"], p["bn1_b"],
                          p["bn1_m"], p["bn1_v"]))
    x = pool_relu(conv_bn(x, p["w2"], p["b2"], p["bn2_g"], p["bn2_b"],
                          p["bn2_m"], p["bn2_v"]))
    feats = jnp.transpose(x, (0, 3, 1, 2)).reshape(x.shape[0], -1)
    h = jnp.maximum(feats @ p["fw1"] + p["fb1"], 0.0)
    h = jnp.maximum(h @ p["fw2"] + p["fb2"], 0.0)
    return h @ p["fw3"] + p["fb3"]


# ---------------------------- parameter init --------------------------------

def init_params(key, in_c=3, num_classes=10, k=3):
    ks = jax.random.split(key, 10)

    def u(kk, shape, fan_in):
        bound = 1.0 / jnp.sqrt(jnp.float32(fan_in))
        return jax.random.uniform(kk, shape, jnp.float32, -bound, bound)

    return {
        # conv1: torch weight (6, in_c, k, k) stored as HWIO (k, k, in_c, 6)
        "w1": u(ks[0], (k, k, in_c, 6), k * k * in_c),
        "b1": u(ks[1], (6,), k * k * in_c),
        "bn1_g": jnp.ones((6,), jnp.float32), "bn1_b": jnp.zeros((6,), jnp.float32),
        "bn1_m": jnp.zeros((6,), jnp.float32), "bn1_v": jnp.ones((6,), jnp.float32),
        # conv2: (16, 6, k, k) stored as HWIO (k, k, 6, 16)
        "w2": u(ks[2], (k, k, 6, 16), k * k * 6),
        "b2": u(ks[3], (16,), k * k * 6),
        "bn2_g": jnp.ones((16,), jnp.float32), "bn2_b": jnp.zeros((16,), jnp.float32),
        "bn2_m": jnp.zeros((16,), jnp.float32), "bn2_v": jnp.ones((16,), jnp.float32),
        # fc layers (weights stored transposed: (in, out); fc1 rows in torch (c,h,w) order)
        "fw1": u(ks[4], (16 * 6 * 6, 120), 16 * 6 * 6),
        "fb1": u(ks[5], (120,), 16 * 6 * 6),
        "fw2": u(ks[6], (120, 84), 120),
        "fb2": u(ks[7], (84,), 120),
        "fw3": u(ks[8], (84, num_classes), 84),
        "fb3": u(ks[9], (num_classes,), 84),
    }


if __name__ == "__main__":
    key = jax.random.PRNGKey(0)
    pkey, xkey = jax.random.split(key)

    in_c, num_classes, k, in_hw = 3, 10, 3, 32
    params = init_params(pkey, in_c=in_c, num_classes=num_classes, k=k)
    kparams = prepare_params(params, in_hw=in_hw)

    # fc1 expects 16*6*6 features -> input spatial must be 32x32:
    # 32 -conv3-> 30 -pool-> 15 -conv3-> 13 -pool-> 6
    x = jax.random.normal(xkey, (2, in_c, in_hw, in_hw), jnp.float32)  # NCHW like torch

    fwd = jax.jit(functools.partial(basic_cnn_forward, num_classes=num_classes))
    logits = fwd(x, kparams)
    jax.block_until_ready(logits)
    assert logits.shape == (2, num_classes), logits.shape

    # correctness guard: compare against a plain-JAX f32 reference of the torch forward
    # (tolerance sized for bf16 weights/activations with f32 accumulation)
    ref = _reference_forward(x, params)
    err = float(jnp.max(jnp.abs(logits - ref)))
    scale = float(jnp.max(jnp.abs(ref)))
    assert err <= 0.03 * scale + 1e-3, f"kernel/reference mismatch: {err} vs scale {scale}"

    print("KERNEL_OK")
</pallas_src>

<mosaic_0001>
module attributes {stable_mosaic.version = 11 : i64} {
  func.func @_fused_cnn_kernel(%arg0: i32, %arg1: memref<3x64x96xbf16, #tpu.memory_space<vmem>>, %arg2: memref<3x96x256xbf16, #tpu.memory_space<vmem>>, %arg3: memref<3x128x256xbf16, #tpu.memory_space<vmem>>, %arg4: memref<6x128x128xbf16, #tpu.memory_space<vmem>>, %arg5: memref<128x128xbf16, #tpu.memory_space<vmem>>, %arg6: memref<128x128xbf16, #tpu.memory_space<vmem>>, %arg7: memref<4x256xf32, #tpu.memory_space<vmem>>, %arg8: memref<2x128xf32, #tpu.memory_space<vmem>>, %arg9: memref<64x128xf32, #tpu.memory_space<vmem>>, %arg10: memref<40x128xf32, #tpu.memory_space<vmem>>, %arg11: memref<32x128xf32, #tpu.memory_space<vmem>>) attributes {dimension_semantics = [#tpu.dimension_semantics<parallel>], iteration_bounds = array<i64: 1>, scalar_prefetch = 0 : i64, scratch_operands = 3 : i64, tpu.core_type = #tpu.core_type<tc>, window_params = [{transform_indices = @transform_0, window_bounds = array<i64: 3, 64, 96>}, {pipeline_mode = #tpu.pipeline_mode<synchronous>, transform_indices = @transform_1, window_bounds = array<i64: 3, 96, 256>}, {pipeline_mode = #tpu.pipeline_mode<synchronous>, transform_indices = @transform_2, window_bounds = array<i64: 3, 128, 256>}, {pipeline_mode = #tpu.pipeline_mode<synchronous>, transform_indices = @transform_3, window_bounds = array<i64: 6, 128, 128>}, {pipeline_mode = #tpu.pipeline_mode<synchronous>, transform_indices = @transform_4, window_bounds = array<i64: 128, 128>}, {pipeline_mode = #tpu.pipeline_mode<synchronous>, transform_indices = @transform_5, window_bounds = array<i64: 128, 128>}, {pipeline_mode = #tpu.pipeline_mode<synchronous>, transform_indices = @transform_6, window_bounds = array<i64: 4, 256>}, {transform_indices = @transform_7, window_bounds = array<i64: 2, 128>}]} {
    %c0 = arith.constant 0 : index
    %c0_0 = arith.constant 0 : index
    %0 = vector.load %arg7[%c0, %c0_0] : memref<4x256xf32, #tpu.memory_space<vmem>>, vector<1x256xf32>
    %c1 = arith.constant 1 : index
    %c0_1 = arith.constant 0 : index
    %1 = vector.load %arg7[%c1, %c0_1] : memref<4x256xf32, #tpu.memory_space<vmem>>, vector<1x256xf32>
    %c2 = arith.constant 2 : index
    %c0_2 = arith.constant 0 : index
    %2 = vector.load %arg7[%c2, %c0_2] : memref<4x256xf32, #tpu.memory_space<vmem>>, vector<1x128xf32>
    %c2_3 = arith.constant 2 : index
    %c128 = arith.constant 128 : index
    %3 = vector.load %arg7[%c2_3, %c128] : memref<4x256xf32, #tpu.memory_space<vmem>>, vector<1x128xf32>
    %c3 = arith.constant 3 : index
    %c0_4 = arith.constant 0 : index
    %4 = vector.load %arg7[%c3, %c0_4] : memref<4x256xf32, #tpu.memory_space<vmem>>, vector<1x128xf32>
    %c0_5 = arith.constant 0 : index
    %c0_6 = arith.constant 0 : index
    %c0_7 = arith.constant 0 : index
    %5 = vector.load %arg1[%c0_5, %c0_6, %c0_7] : memref<3x64x96xbf16, #tpu.memory_space<vmem>>, vector<1x64x96xbf16>
    %6 = vector.shape_cast %5 : vector<1x64x96xbf16> to vector<64x96xbf16>
    %c0_8 = arith.constant 0 : index
    %c0_9 = arith.constant 0 : index
    %c0_10 = arith.constant 0 : index
    %7 = vector.load %arg2[%c0_8, %c0_9, %c0_10] : memref<3x96x256xbf16, #tpu.memory_space<vmem>>, vector<1x96x256xbf16>
    %8 = vector.shape_cast %7 : vector<1x96x256xbf16> to vector<96x256xbf16>
    %cst = arith.constant dense<0.000000e+00> : vector<64x256xf32>
    %9 = tpu.matmul %6, %8, %cst {dimension_numbers = #tpu.dot_dimension_numbers<[1], [0], [0], [1], [0, 0, 1, 1], [], []>} : vector<64x96xbf16>, vector<96x256xbf16>, vector<64x256xf32> -> vector<64x256xf32>
    %c1_11 = arith.constant 1 : index
    %c0_12 = arith.constant 0 : index
    %c0_13 = arith.constant 0 : index
    %10 = vector.load %arg1[%c1_11, %c0_12, %c0_13] : memref<3x64x96xbf16, #tpu.memory_space<vmem>>, vector<1x64x96xbf16>
    %11 = vector.shape_cast %10 : vector<1x64x96xbf16> to vector<64x96xbf16>
    %c1_14 = arith.constant 1 : index
    %c0_15 = arith.constant 0 : index
    %c0_16 = arith.constant 0 : index
    %12 = vector.load %arg2[%c1_14, %c0_15, %c0_16] : memref<3x96x256xbf16, #tpu.memory_space<vmem>>, vector<1x96x256xbf16>
    %13 = vector.shape_cast %12 : vector<1x96x256xbf16> to vector<96x256xbf16>
    %cst_17 = arith.constant dense<0.000000e+00> : vector<64x256xf32>
    %14 = tpu.matmul %11, %13, %cst_17 {dimension_numbers = #tpu.dot_dimension_numbers<[1], [0], [0], [1], [0, 0, 1, 1], [], []>} : vector<64x96xbf16>, vector<96x256xbf16>, vector<64x256xf32> -> vector<64x256xf32>
    %15 = arith.addf %9, %14 : vector<64x256xf32>
    %c2_18 = arith.constant 2 : index
    %c0_19 = arith.constant 0 : index
    %c0_20 = arith.constant 0 : index
    %16 = vector.load %arg1[%c2_18, %c0_19, %c0_20] : memref<3x64x96xbf16, #tpu.memory_space<vmem>>, vector<1x64x96xbf16>
    %17 = vector.shape_cast %16 : vector<1x64x96xbf16> to vector<64x96xbf16>
    %c2_21 = arith.constant 2 : index
    %c0_22 = arith.constant 0 : index
    %c0_23 = arith.constant 0 : index
    %18 = vector.load %arg2[%c2_21, %c0_22, %c0_23] : memref<3x96x256xbf16, #tpu.memory_space<vmem>>, vector<1x96x256xbf16>
    %19 = vector.shape_cast %18 : vector<1x96x256xbf16> to vector<96x256xbf16>
    %cst_24 = arith.constant dense<0.000000e+00> : vector<64x256xf32>
    %20 = tpu.matmul %17, %19, %cst_24 {dimension_numbers = #tpu.dot_dimension_numbers<[1], [0], [0], [1], [0, 0, 1, 1], [], []>} : vector<64x96xbf16>, vector<96x256xbf16>, vector<64x256xf32> -> vector<64x256xf32>
    %21 = arith.addf %15, %20 : vector<64x256xf32>
    %22 = vector.broadcast %0 : vector<1x256xf32> to vector<64x256xf32>
    %23 = arith.addf %21, %22 : vector<64x256xf32>
    %24 = vector.extract_strided_slice %23 {offsets = [0, 0], sizes = [64, 128], strides = [1, 1]} : vector<64x256xf32> to vector<64x128xf32>
    %25 = vector.extract_strided_slice %23 {offsets = [0, 128], sizes = [64, 128], strides = [1, 1]} : vector<64x256xf32> to vector<64x128xf32>
    %26 = arith.maximumf %24, %25 : vector<64x128xf32>
    %c0_25 = arith.constant 0 : index
    %c0_26 = arith.constant 0 : index
    %27 = vector.load %arg9[%c0_25, %c0_26] : memref<64x128xf32, #tpu.memory_space<vmem>>, vector<64x128xf32>
    tpu.vector_store %arg9[%c0_25, %c0_26], %26 {strides = array<i32>} : memref<64x128xf32, #tpu.memory_space<vmem>>, vector<64x128xf32>,
    %c0_27 = arith.constant 0 : index
    %c0_28 = arith.constant 0 : index
    %28 = tpu.strided_load %arg9[%c0_27, %c0_28] {strides = array<i32: 2, 1>} : memref<64x128xf32, #tpu.memory_space<vmem>>, vector<32x128xf32>
    %c1_29 = arith.constant 1 : index
    %c0_30 = arith.constant 0 : index
    %29 = tpu.strided_load %arg9[%c1_29, %c0_30] {strides = array<i32: 2, 1>} : memref<64x128xf32, #tpu.memory_space<vmem>>, vector<32x128xf32>
    %30 = arith.maximumf %28, %29 : vector<32x128xf32>
    %cst_31 = arith.constant 0.000000e+00 : f32
    %31 = vector.broadcast %cst_31 : f32 to vector<32x128xf32>
    %32 = arith.maximumf %30, %31 : vector<32x128xf32>
    %c0_32 = arith.constant 0 : index
    %c0_33 = arith.constant 0 : index
    %33 = vector.load %arg10[%c0_32, %c0_33] : memref<40x128xf32, #tpu.memory_space<vmem>>, vector<32x128xf32>
    tpu.vector_store %arg10[%c0_32, %c0_33], %32 {strides = array<i32>} : memref<40x128xf32, #tpu.memory_space<vmem>>, vector<32x128xf32>,
    %cst_34 = arith.constant 0.000000e+00 : f32
    %34 = vector.broadcast %cst_34 : f32 to vector<8x128xf32>
    %c32 = arith.constant 32 : index
    %c0_35 = arith.constant 0 : index
    %35 = vector.load %arg10[%c32, %c0_35] : memref<40x128xf32, #tpu.memory_space<vmem>>, vector<8x128xf32>
    tpu.vector_store %arg10[%c32, %c0_35], %34 {strides = array<i32>} : memref<40x128xf32, #tpu.memory_space<vmem>>, vector<8x128xf32>,
    %c0_36 = arith.constant 0 : index
    %c0_37 = arith.constant 0 : index
    %36 = vector.load %arg10[%c0_36, %c0_37] : memref<40x128xf32, #tpu.memory_space<vmem>>, vector<32x128xf32>
    %37 = arith.truncf %36 : vector<32x128xf32> to vector<32x128xbf16>
    %c0_38 = arith.constant 0 : index
    %c0_39 = arith.constant 0 : index
    %c0_40 = arith.constant 0 : index
    %38 = vector.load %arg3[%c0_38, %c0_39, %c0_40] : memref<3x128x256xbf16, #tpu.memory_space<vmem>>, vector<1x128x256xbf16>
    %39 = vector.shape_cast %38 : vector<1x128x256xbf16> to vector<128x256xbf16>
    %cst_41 = arith.constant dense<0.000000e+00> : vector<32x256xf32>
    %40 = tpu.matmul %37, %39, %cst_41 {dimension_numbers = #tpu.dot_dimension_numbers<[1], [0], [0], [1], [0, 0, 1, 1], [], []>} : vector<32x128xbf16>, vector<128x256xbf16>, vector<32x256xf32> -> vector<32x256xf32>
    %c1_42 = arith.constant 1 : index
    %c0_43 = arith.constant 0 : index
    %41 = vector.load %arg10[%c1_42, %c0_43] : memref<40x128xf32, #tpu.memory_space<vmem>>, vector<32x128xf32>
    %42 = arith.truncf %41 : vector<32x128xf32> to vector<32x128xbf16>
    %c1_44 = arith.constant 1 : index
    %c0_45 = arith.constant 0 : index
    %c0_46 = arith.constant 0 : index
    %43 = vector.load %arg3[%c1_44, %c0_45, %c0_46] : memref<3x128x256xbf16, #tpu.memory_space<vmem>>, vector<1x128x256xbf16>
    %44 = vector.shape_cast %43 : vector<1x128x256xbf16> to vector<128x256xbf16>
    %cst_47 = arith.constant dense<0.000000e+00> : vector<32x256xf32>
    %45 = tpu.matmul %42, %44, %cst_47 {dimension_numbers = #tpu.dot_dimension_numbers<[1], [0], [0], [1], [0, 0, 1, 1], [], []>} : vector<32x128xbf16>, vector<128x256xbf16>, vector<32x256xf32> -> vector<32x256xf32>
    %46 = arith.addf %40, %45 : vector<32x256xf32>
    %c2_48 = arith.constant 2 : index
    %c0_49 = arith.constant 0 : index
    %47 = vector.load %arg10[%c2_48, %c0_49] : memref<40x128xf32, #tpu.memory_space<vmem>>, vector<32x128xf32>
    %48 = arith.truncf %47 : vector<32x128xf32> to vector<32x128xbf16>
    %c2_50 = arith.constant 2 : index
    %c0_51 = arith.constant 0 : index
    %c0_52 = arith.constant 0 : index
    %49 = vector.load %arg3[%c2_50, %c0_51, %c0_52] : memref<3x128x256xbf16, #tpu.memory_space<vmem>>, vector<1x128x256xbf16>
    %50 = vector.shape_cast %49 : vector<1x128x256xbf16> to vector<128x256xbf16>
    %cst_53 = arith.constant dense<0.000000e+00> : vector<32x256xf32>
    %51 = tpu.matmul %48, %50, %cst_53 {dimension_numbers = #tpu.dot_dimension_numbers<[1], [0], [0], [1], [0, 0, 1, 1], [], []>} : vector<32x128xbf16>, vector<128x256xbf16>, vector<32x256xf32> -> vector<32x256xf32>
    %52 = arith.addf %46, %51 : vector<32x256xf32>
    %53 = vector.broadcast %1 : vector<1x256xf32> to vector<32x256xf32>
    %54 = arith.addf %52, %53 : vector<32x256xf32>
    %55 = vector.extract_strided_slice %54 {offsets = [0, 0], sizes = [32, 128], strides = [1, 1]} : vector<32x256xf32> to vector<32x128xf32>
    %56 = vector.extract_strided_slice %54 {offsets = [0, 128], sizes = [32, 128], strides = [1, 1]} : vector<32x256xf32> to vector<32x128xf32>
    %57 = arith.maximumf %55, %56 : vector<32x128xf32>
    %c0_54 = arith.constant 0 : index
    %c0_55 = arith.constant 0 : index
    %58 = vector.load %arg11[%c0_54, %c0_55] : memref<32x128xf32, #tpu.memory_space<vmem>>, vector<32x128xf32>
    tpu.vector_store %arg11[%c0_54, %c0_55], %57 {strides = array<i32>} : memref<32x128xf32, #tpu.memory_space<vmem>>, vector<32x128xf32>,
    %cst_56 = arith.constant 0.000000e+00 : f32
    %59 = vector.broadcast %cst_56 : f32 to vector<2x128xf32>
    %c0_57 = arith.constant 0 : index
    %c0_58 = arith.constant 0 : index
    %60 = tpu.strided_load %arg11[%c0_57, %c0_58] {strides = array<i32: 16, 1>} : memref<32x128xf32, #tpu.memory_space<vmem>>, vector<2x128xf32>
    %c1_59 = arith.constant 1 : index
    %c0_60 = arith.constant 0 : index
    %61 = tpu.strided_load %arg11[%c1_59, %c0_60] {strides = array<i32: 16, 1>} : memref<32x128xf32, #tpu.memory_space<vmem>>, vector<2x128xf32>
    %62 = arith.maximumf %60, %61 : vector<2x128xf32>
    %cst_61 = arith.constant 0.000000e+00 : f32
    %63 = vector.broadcast %cst_61 : f32 to vector<2x128xf32>
    %64 = arith.maximumf %62, %63 : vector<2x128xf32>
    %65 = arith.truncf %64 : vector<2x128xf32> to vector<2x128xbf16>
    %c0_62 = arith.constant 0 : index
    %c0_63 = arith.constant 0 : index
    %c0_64 = arith.constant 0 : index
    %66 = vector.load %arg4[%c0_62, %c0_63, %c0_64] : memref<6x128x128xbf16, #tpu.memory_space<vmem>>, vector<1x128x128xbf16>
    %67 = vector.shape_cast %66 : vector<1x128x128xbf16> to vector<128x128xbf16>
    %cst_65 = arith.constant dense<0.000000e+00> : vector<2x128xf32>
    %68 = tpu.matmul %65, %67, %cst_65 {dimension_numbers = #tpu.dot_dimension_numbers<[1], [0], [0], [1], [0, 0, 1, 1], [], []>} : vector<2x128xbf16>, vector<128x128xbf16>, vector<2x128xf32> -> vector<2x128xf32>
    %69 = arith.addf %59, %68 : vector<2x128xf32>
    %c2_66 = arith.constant 2 : index
    %c0_67 = arith.constant 0 : index
    %70 = tpu.strided_load %arg11[%c2_66, %c0_67] {strides = array<i32: 16, 1>} : memref<32x128xf32, #tpu.memory_space<vmem>>, vector<2x128xf32>
    %c3_68 = arith.constant 3 : index
    %c0_69 = arith.constant 0 : index
    %71 = tpu.strided_load %arg11[%c3_68, %c0_69] {strides = array<i32: 16, 1>} : memref<32x128xf32, #tpu.memory_space<vmem>>, vector<2x128xf32>
    %72 = arith.maximumf %70, %71 : vector<2x128xf32>
    %cst_70 = arith.constant 0.000000e+00 : f32
    %73 = vector.broadcast %cst_70 : f32 to vector<2x128xf32>
    %74 = arith.maximumf %72, %73 : vector<2x128xf32>
    %75 = arith.truncf %74 : vector<2x128xf32> to vector<2x128xbf16>
    %c1_71 = arith.constant 1 : index
    %c0_72 = arith.constant 0 : index
    %c0_73 = arith.constant 0 : index
    %76 = vector.load %arg4[%c1_71, %c0_72, %c0_73] : memref<6x128x128xbf16, #tpu.memory_space<vmem>>, vector<1x128x128xbf16>
    %77 = vector.shape_cast %76 : vector<1x128x128xbf16> to vector<128x128xbf16>
    %cst_74 = arith.constant dense<0.000000e+00> : vector<2x128xf32>
    %78 = tpu.matmul %75, %77, %cst_74 {dimension_numbers = #tpu.dot_dimension_numbers<[1], [0], [0], [1], [0, 0, 1, 1], [], []>} : vector<2x128xbf16>, vector<128x128xbf16>, vector<2x128xf32> -> vector<2x128xf32>
    %79 = arith.addf %69, %78 : vector<2x128xf32>
    %c4 = arith.constant 4 : index
    %c0_75 = arith.constant 0 : index
    %80 = tpu.strided_load %arg11[%c4, %c0_75] {strides = array<i32: 16, 1>} : memref<32x128xf32, #tpu.memory_space<vmem>>, vector<2x128xf32>
    %c5 = arith.constant 5 : index
    %c0_76 = arith.constant 0 : index
    %81 = tpu.strided_load %arg11[%c5, %c0_76] {strides = array<i32: 16, 1>} : memref<32x128xf32, #tpu.memory_space<vmem>>, vector<2x128xf32>
    %82 = arith.maximumf %80, %81 : vector<2x128xf32>
    %cst_77 = arith.constant 0.000000e+00 : f32
    %83 = vector.broadcast %cst_77 : f32 to vector<2x128xf32>
    %84 = arith.maximumf %82, %83 : vector<2x128xf32>
    %85 = arith.truncf %84 : vector<2x128xf32> to vector<2x128xbf16>
    %c2_78 = arith.constant 2 : index
    %c0_79 = arith.constant 0 : index
    %c0_80 = arith.constant 0 : index
    %86 = vector.load %arg4[%c2_78, %c0_79, %c0_80] : memref<6x128x128xbf16, #tpu.memory_space<vmem>>, vector<1x128x128xbf16>
    %87 = vector.shape_cast %86 : vector<1x128x128xbf16> to vector<128x128xbf16>
    %cst_81 = arith.constant dense<0.000000e+00> : vector<2x128xf32>
    %88 = tpu.matmul %85, %87, %cst_81 {dimension_numbers = #tpu.dot_dimension_numbers<[1], [0], [0], [1], [0, 0, 1, 1], [], []>} : vector<2x128xbf16>, vector<128x128xbf16>, vector<2x128xf32> -> vector<2x128xf32>
    %89 = arith.addf %79, %88 : vector<2x128xf32>
    %c6 = arith.constant 6 : index
    %c0_82 = arith.constant 0 : index
    %90 = tpu.strided_load %arg11[%c6, %c0_82] {strides = array<i32: 16, 1>} : memref<32x128xf32, #tpu.memory_space<vmem>>, vector<2x128xf32>
    %c7 = arith.constant 7 : index
    %c0_83 = arith.constant 0 : index
    %91 = tpu.strided_load %arg11[%c7, %c0_83] {strides = array<i32: 16, 1>} : memref<32x128xf32, #tpu.memory_space<vmem>>, vector<2x128xf32>
    %92 = arith.maximumf %90, %91 : vector<2x128xf32>
    %cst_84 = arith.constant 0.000000e+00 : f32
    %93 = vector.broadcast %cst_84 : f32 to vector<2x128xf32>
    %94 = arith.maximumf %92, %93 : vector<2x128xf32>
    %95 = arith.truncf %94 : vector<2x128xf32> to vector<2x128xbf16>
    %c3_85 = arith.constant 3 : index
    %c0_86 = arith.constant 0 : index
    %c0_87 = arith.constant 0 : index
    %96 = vector.load %arg4[%c3_85, %c0_86, %c0_87] : memref<6x128x128xbf16, #tpu.memory_space<vmem>>, vector<1x128x128xbf16>
    %97 = vector.shape_cast %96 : vector<1x128x128xbf16> to vector<128x128xbf16>
    %cst_88 = arith.constant dense<0.000000e+00> : vector<2x128xf32>
    %98 = tpu.matmul %95, %97, %cst_88 {dimension_numbers = #tpu.dot_dimension_numbers<[1], [0], [0], [1], [0, 0, 1, 1], [], []>} : vector<2x128xbf16>, vector<128x128xbf16>, vector<2x128xf32> -> vector<2x128xf32>
    %99 = arith.addf %89, %98 : vector<2x128xf32>
    %c8 = arith.constant 8 : index
    %c0_89 = arith.constant 0 : index
    %100 = tpu.strided_load %arg11[%c8, %c0_89] {strides = array<i32: 16, 1>} : memref<32x128xf32, #tpu.memory_space<vmem>>, vector<2x128xf32>
    %c9 = arith.constant 9 : index
    %c0_90 = arith.constant 0 : index
    %101 = tpu.strided_load %arg11[%c9, %c0_90] {strides = array<i32: 16, 1>} : memref<32x128xf32, #tpu.memory_space<vmem>>, vector<2x128xf32>
    %102 = arith.maximumf %100, %101 : vector<2x128xf32>
    %cst_91 = arith.constant 0.000000e+00 : f32
    %103 = vector.broadcast %cst_91 : f32 to vector<2x128xf32>
    %104 = arith.maximumf %102, %103 : vector<2x128xf32>
    %105 = arith.truncf %104 : vector<2x128xf32> to vector<2x128xbf16>
    %c4_92 = arith.constant 4 : index
    %c0_93 = arith.constant 0 : index
    %c0_94 = arith.constant 0 : index
    %106 = vector.load %arg4[%c4_92, %c0_93, %c0_94] : memref<6x128x128xbf16, #tpu.memory_space<vmem>>, vector<1x128x128xbf16>
    %107 = vector.shape_cast %106 : vector<1x128x128xbf16> to vector<128x128xbf16>
    %cst_95 = arith.constant dense<0.000000e+00> : vector<2x128xf32>
    %108 = tpu.matmul %105, %107, %cst_95 {dimension_numbers = #tpu.dot_dimension_numbers<[1], [0], [0], [1], [0, 0, 1, 1], [], []>} : vector<2x128xbf16>, vector<128x128xbf16>, vector<2x128xf32> -> vector<2x128xf32>
    %109 = arith.addf %99, %108 : vector<2x128xf32>
    %c10 = arith.constant 10 : index
    %c0_96 = arith.constant 0 : index
    %110 = tpu.strided_load %arg11[%c10, %c0_96] {strides = array<i32: 16, 1>} : memref<32x128xf32, #tpu.memory_space<vmem>>, vector<2x128xf32>
    %c11 = arith.constant 11 : index
    %c0_97 = arith.constant 0 : index
    %111 = tpu.strided_load %arg11[%c11, %c0_97] {strides = array<i32: 16, 1>} : memref<32x128xf32, #tpu.memory_space<vmem>>, vector<2x128xf32>
    %112 = arith.maximumf %110, %111 : vector<2x128xf32>
    %cst_98 = arith.constant 0.000000e+00 : f32
    %113 = vector.broadcast %cst_98 : f32 to vector<2x128xf32>
    %114 = arith.maximumf %112, %113 : vector<2x128xf32>
    %115 = arith.truncf %114 : vector<2x128xf32> to vector<2x128xbf16>
    %c5_99 = arith.constant 5 : index
    %c0_100 = arith.constant 0 : index
    %c0_101 = arith.constant 0 : index
    %116 = vector.load %arg4[%c5_99, %c0_100, %c0_101] : memref<6x128x128xbf16, #tpu.memory_space<vmem>>, vector<1x128x128xbf16>
    %117 = vector.shape_cast %116 : vector<1x128x128xbf16> to vector<128x128xbf16>
    %cst_102 = arith.constant dense<0.000000e+00> : vector<2x128xf32>
    %118 = tpu.matmul %115, %117, %cst_102 {dimension_numbers = #tpu.dot_dimension_numbers<[1], [0], [0], [1], [0, 0, 1, 1], [], []>} : vector<2x128xbf16>, vector<128x128xbf16>, vector<2x128xf32> -> vector<2x128xf32>
    %119 = arith.addf %109, %118 : vector<2x128xf32>
    %120 = vector.broadcast %2 : vector<1x128xf32> to vector<2x128xf32>
    %121 = arith.addf %119, %120 : vector<2x128xf32>
    %cst_103 = arith.constant 0.000000e+00 : f32
    %122 = vector.broadcast %cst_103 : f32 to vector<2x128xf32>
    %123 = arith.maximumf %121, %122 : vector<2x128xf32>
    %124 = arith.truncf %123 : vector<2x128xf32> to vector<2x128xbf16>
    %c0_104 = arith.constant 0 : index
    %c0_105 = arith.constant 0 : index
    %125 = vector.load %arg5[%c0_104, %c0_105] : memref<128x128xbf16, #tpu.memory_space<vmem>>, vector<128x128xbf16>
    %cst_106 = arith.constant dense<0.000000e+00> : vector<2x128xf32>
    %126 = tpu.matmul %124, %125, %cst_106 {dimension_numbers = #tpu.dot_dimension_numbers<[1], [0], [0], [1], [0, 0, 1, 1], [], []>} : vector<2x128xbf16>, vector<128x128xbf16>, vector<2x128xf32> -> vector<2x128xf32>
    %127 = vector.broadcast %3 : vector<1x128xf32> to vector<2x128xf32>
    %128 = arith.addf %126, %127 : vector<2x128xf32>
    %cst_107 = arith.constant 0.000000e+00 : f32
    %129 = vector.broadcast %cst_107 : f32 to vector<2x128xf32>
    %130 = arith.maximumf %128, %129 : vector<2x128xf32>
    %131 = arith.truncf %130 : vector<2x128xf32> to vector<2x128xbf16>
    %c0_108 = arith.constant 0 : index
    %c0_109 = arith.constant 0 : index
    %132 = vector.load %arg6[%c0_108, %c0_109] : memref<128x128xbf16, #tpu.memory_space<vmem>>, vector<128x128xbf16>
    %cst_110 = arith.constant dense<0.000000e+00> : vector<2x128xf32>
    %133 = tpu.matmul %131, %132, %cst_110 {dimension_numbers = #tpu.dot_dimension_numbers<[1], [0], [0], [1], [0, 0, 1, 1], [], []>} : vector<2x128xbf16>, vector<128x128xbf16>, vector<2x128xf32> -> vector<2x128xf32>
    %134 = vector.broadcast %4 : vector<1x128xf32> to vector<2x128xf32>
    %135 = arith.addf %133, %134 : vector<2x128xf32>
    %c0_111 = arith.constant 0 : index
    %c0_112 = arith.constant 0 : index
    %136 = vector.load %arg8[%c0_111, %c0_112] : memref<2x128xf32, #tpu.memory_space<vmem>>, vector<2x128xf32>
    tpu.vector_store %arg8[%c0_111, %c0_112], %135 {strides = array<i32>} : memref<2x128xf32, #tpu.memory_space<vmem>>, vector<2x128xf32>,
    return
  }
  func.func @transform_0(%arg0: i32) -> (i32, i32, i32) {
    %c0_i32 = arith.constant 0 : i32
    %c0_i32_0 = arith.constant 0 : i32
    %c0_i32_1 = arith.constant 0 : i32
    return %c0_i32, %arg0, %c0_i32_0 : i32, i32, i32
  }
  func.func @transform_1(%arg0: i32) -> (i32, i32, i32) {
    %c0_i32 = arith.constant 0 : i32
    %c0_i32_0 = arith.constant 0 : i32
    %c0_i32_1 = arith.constant 0 : i32
    %c0_i32_2 = arith.constant 0 : i32
    return %c0_i32, %c0_i32_0, %c0_i32_1 : i32, i32, i32
  }
  func.func @transform_2(%arg0: i32) -> (i32, i32, i32) {
    %c0_i32 = arith.constant 0 : i32
    %c0_i32_0 = arith.constant 0 : i32
    %c0_i32_1 = arith.constant 0 : i32
    %c0_i32_2 = arith.constant 0 : i32
    return %c0_i32, %c0_i32_0, %c0_i32_1 : i32, i32, i32
  }
  func.func @transform_3(%arg0: i32) -> (i32, i32, i32) {
    %c0_i32 = arith.constant 0 : i32
    %c0_i32_0 = arith.constant 0 : i32
    %c0_i32_1 = arith.constant 0 : i32
    %c0_i32_2 = arith.constant 0 : i32
    return %c0_i32, %c0_i32_0, %c0_i32_1 : i32, i32, i32
  }
  func.func @transform_4(%arg0: i32) -> (i32, i32) {
    %c0_i32 = arith.constant 0 : i32
    %c0_i32_0 = arith.constant 0 : i32
    %c0_i32_1 = arith.constant 0 : i32
    return %c0_i32, %c0_i32_0 : i32, i32
  }
  func.func @transform_5(%arg0: i32) -> (i32, i32) {
    %c0_i32 = arith.constant 0 : i32
    %c0_i32_0 = arith.constant 0 : i32
    %c0_i32_1 = arith.constant 0 : i32
    return %c0_i32, %c0_i32_0 : i32, i32
  }
  func.func @transform_6(%arg0: i32) -> (i32, i32) {
    %c0_i32 = arith.constant 0 : i32
    %c0_i32_0 = arith.constant 0 : i32
    %c0_i32_1 = arith.constant 0 : i32
    return %c0_i32, %c0_i32_0 : i32, i32
  }
  func.func @transform_7(%arg0: i32) -> (i32, i32) {
    %c0_i32 = arith.constant 0 : i32
    %c0_i32_0 = arith.constant 0 : i32
    return %arg0, %c0_i32 : i32, i32
  }
}

</mosaic_0001>

<llo_original>
// kernel: basic_cnn_forward.1
$region0: #{basic_cnn_forward.1}
  #allocation0 [shape = 'u32[]', space=smem, size = 0x4, offset = 0x4, fixed_abs, tag = 'smem constant byte address 0x4 - core index']
  #allocation1 [shape = 'u32[144,128]{1,0:T(1,128)}', space=vmem, size = 0x12000, scoped, tag = 'internal scratch']
  #allocation2 [shape = 'f32[64,128]{1,0:T(8,128)}', space=vmem, size = 0x8000, scoped, tag = 'scratch operand']
  #allocation3 [shape = 'f32[40,128]{1,0:T(8,128)}', space=vmem, size = 0x5000, scoped, tag = 'scratch operand']
  #allocation4 [shape = 'f32[32,128]{1,0:T(8,128)}', space=vmem, size = 0x4000, scoped, tag = 'scratch operand']
  %s0 = inlined_call_operand.vmem [shape: bf16[3,64,96], index: 0, kind: input, shape index: {}]
  %s1 = inlined_call_operand.vmem [shape: bf16[3,96,256], index: 1, kind: input, shape index: {}]
  %s2 = inlined_call_operand.vmem [shape: bf16[3,128,256], index: 2, kind: input, shape index: {}]
  %s3 = inlined_call_operand.vmem [shape: bf16[6,128,128], index: 3, kind: input, shape index: {}]
  %s4 = inlined_call_operand.vmem [shape: bf16[128,128], index: 4, kind: input, shape index: {}]
  %s5 = inlined_call_operand.vmem [shape: bf16[128,128], index: 5, kind: input, shape index: {}]
  %s6 = inlined_call_operand.vmem [shape: f32[4,256], index: 6, kind: input, shape index: {}]
  %s7 = inlined_call_operand.hbm [shape: f32[2,128], index: 7, kind: output, shape index: {}]
  %s8 = sld [smem:[#allocation0]]
  $region38: #{basic_cnn_forward.1} parent=0
    _
  %s10 = ssub.s32 1, %s8
  %s11 = scalar_select 0, %s10, %s8
  $region1: #{basic_cnn_forward.1} parent=0
    #allocation5 [shape = 'u8[1024]{0}', space=vmem, size = 0x400, scoped, tag = 'output window, operand 0, single buffered']
    #allocation6 [shape = 's32[1]{0}', space=sflag, size = 0x4, scoped, tag = 'scoped memory for basic_cnn_forward.1']
    %12 = vsyncpa [#allocation6], 0
    // Predicated region
    $region2: #{basic_cnn_forward.1} parent=1 // pred_check
      _
    $region3: #{basic_cnn_forward.1} parent=1 // pred_check_branch
      %14 = sbr.rel (0) target = $region5
    $region4: #{basic_cnn_forward.1} parent=1 // pred_region
      _
    $region5: #{basic_cnn_forward.1} parent=1 // pred_fallthru
      _
    // Predicated region
    $region6: #{basic_cnn_forward.1} parent=1 // pred_check
      _
    $region7: #{basic_cnn_forward.1} parent=1 // pred_check_branch
      %16 = sbr.rel (0) target = $region9
    $region8: #{basic_cnn_forward.1} parent=1 // pred_region
      _
    $region9: #{basic_cnn_forward.1} parent=1 // pred_fallthru
      _
    // Predicated region
    $region10: #{basic_cnn_forward.1} parent=1 // pred_check
      _
    $region11: #{basic_cnn_forward.1} parent=1 // pred_check_branch
      %18 = sbr.rel (0) target = $region13
    $region12: #{basic_cnn_forward.1} parent=1 // pred_region
      _
    $region13: #{basic_cnn_forward.1} parent=1 // pred_fallthru
      _
    // Predicated region
    $region14: #{basic_cnn_forward.1} parent=1 // pred_check
      _
    $region15: #{basic_cnn_forward.1} parent=1 // pred_check_branch
      %20 = sbr.rel (0) target = $region17
    $region16: #{basic_cnn_forward.1} parent=1 // pred_region
      _
    $region17: #{basic_cnn_forward.1} parent=1 // pred_fallthru
      _
    // Predicated region
    $region18: #{basic_cnn_forward.1} parent=1 // pred_check
      _
    $region19: #{basic_cnn_forward.1} parent=1 // pred_check_branch
      %22 = sbr.rel (0) target = $region21
    $region20: #{basic_cnn_forward.1} parent=1 // pred_region
      _
    $region21: #{basic_cnn_forward.1} parent=1 // pred_fallthru
      _
    // Predicated region
    $region22: #{basic_cnn_forward.1} parent=1 // pred_check
      _
    $region23: #{basic_cnn_forward.1} parent=1 // pred_check_branch
      %24 = sbr.rel (0) target = $region25
    $region24: #{basic_cnn_forward.1} parent=1 // pred_region
      _
    $region25: #{basic_cnn_forward.1} parent=1 // pred_fallthru
      _
    // Predicated region
    $region26: #{basic_cnn_forward.1} parent=1 // pred_check
      _
    $region27: #{basic_cnn_forward.1} parent=1 // pred_check_branch
      %26 = sbr.rel (0) target = $region29
    $region28: #{basic_cnn_forward.1} parent=1 // pred_region
      _
    $region29: #{basic_cnn_forward.1} parent=1 // pred_fallthru
      _
    %v28 = vld [vmem:[%s6] ss:$4 sm:$0x3]
    %s29 = scalar_lea.vmem %s6, 1
    %v30 = vld [vmem:[%s29] ss:$4 sm:$0x3]
    %v31 = vld [vmem:[%s6 + $0x2] sm:$0x1]
    %v32 = vld [vmem:[%s6 + $0x6] sm:$0x1]
    %v33 = vld [vmem:[%s6 + $0x3] sm:$0x1]
    %v34 = vld [vmem:[%s0] sm:$0xf]
    %v35 = vld [vmem:[%s0 + $0x4] sm:$0xf]
    %v36 = vld [vmem:[%s0 + $0x8] sm:$0xf]
    %v37 = vld [vmem:[%s0 + $0xc] sm:$0xf]
    %v38 = vld [vmem:[%s0 + $0x10] sm:$0xf]
    %v39 = vld [vmem:[%s0 + $0x14] sm:$0xf]
    %v40 = vld [vmem:[%s0 + $0x18] sm:$0xf]
    %v41 = vld [vmem:[%s0 + $0x1c] sm:$0xf]
    %v42 = vld [vmem:[%s1] sm:$0xff]
    %v43 = vld [vmem:[%s1 + $0x8] sm:$0xff]
    %v44 = vld [vmem:[%s1 + $0x10] sm:$0xff]
    %v45 = vld [vmem:[%s1 + $0x18] sm:$0xff]
    %v46 = vld [vmem:[%s1 + $0x20] sm:$0xff]
    %v47 = vld [vmem:[%s1 + $0x28] sm:$0xff]
    %v48 = vld [vmem:[%s1 + $0x30] sm:$0xff]
    %v49 = vld [vmem:[%s1 + $0x38] sm:$0xff]
    %v50 = vld [vmem:[%s1 + $0x40] sm:$0xff]
    %v51 = vld [vmem:[%s1 + $0x48] sm:$0xff]
    %v52 = vld [vmem:[%s1 + $0x50] sm:$0xff]
    %v53 = vld [vmem:[%s1 + $0x58] sm:$0xff]
    %s54 = scalar_lea.vmem %s0, 32
    %v55 = vld [vmem:[%s54] sm:$0xf]
    %v56 = vld [vmem:[%s54 + $0x4] sm:$0xf]
    %v57 = vld [vmem:[%s54 + $0x8] sm:$0xf]
    %v58 = vld [vmem:[%s54 + $0xc] sm:$0xf]
    %v59 = vld [vmem:[%s54 + $0x10] sm:$0xf]
    %v60 = vld [vmem:[%s54 + $0x14] sm:$0xf]
    %v61 = vld [vmem:[%s54 + $0x18] sm:$0xf]
    %v62 = vld [vmem:[%s54 + $0x1c] sm:$0xf]
    %s63 = scalar_lea.vmem %s1, 96
    %v64 = vld [vmem:[%s63] sm:$0xff]
    %v65 = vld [vmem:[%s63 + $0x8] sm:$0xff]
    %v66 = vld [vmem:[%s63 + $0x10] sm:$0xff]
    %v67 = vld [vmem:[%s63 + $0x18] sm:$0xff]
    %v68 = vld [vmem:[%s63 + $0x20] sm:$0xff]
    %v69 = vld [vmem:[%s63 + $0x28] sm:$0xff]
    %v70 = vld [vmem:[%s63 + $0x30] sm:$0xff]
    %v71 = vld [vmem:[%s63 + $0x38] sm:$0xff]
    %v72 = vld [vmem:[%s63 + $0x40] sm:$0xff]
    %v73 = vld [vmem:[%s63 + $0x48] sm:$0xff]
    %v74 = vld [vmem:[%s63 + $0x50] sm:$0xff]
    %v75 = vld [vmem:[%s63 + $0x58] sm:$0xff]
    %v84 = vunpack.c.l.b16 %v55
    %v85 = vunpack.c.l.b16 %v56
    %v86 = vunpack.c.l.b16 %v57
    %v87 = vunpack.c.l.b16 %v58
    %v88 = vunpack.c.l.b16 %v59
    %v89 = vunpack.c.l.b16 %v60
    %v90 = vunpack.c.l.b16 %v61
    %v91 = vunpack.c.l.b16 %v62
    %v92 = vpack.c.b16 %v85, %v84
    %v93 = vpack.c.b16 %v87, %v86
    %v94 = vpack.c.b16 %v89, %v88
    %v95 = vpack.c.b16 %v91, %v90
    %v108 = vunpack.c.l.b16 %v64
    %v109 = vunpack.c.h.b16 %v64
    %v110 = vunpack.c.l.b16 %v65
    %v111 = vunpack.c.h.b16 %v65
    %v112 = vunpack.c.l.b16 %v66
    %v113 = vunpack.c.h.b16 %v66
    %v114 = vunpack.c.l.b16 %v67
    %v115 = vunpack.c.h.b16 %v67
    %v116 = vunpack.c.l.b16 %v68
    %v117 = vunpack.c.h.b16 %v68
    %v118 = vunpack.c.l.b16 %v69
    %v119 = vunpack.c.h.b16 %v69
    %v120 = vunpack.c.l.b16 %v70
    %v121 = vunpack.c.h.b16 %v70
    %v122 = vunpack.c.l.b16 %v71
    %v123 = vunpack.c.h.b16 %v71
    %v124 = vunpack.c.l.b16 %v72
    %v125 = vunpack.c.h.b16 %v72
    %v126 = vunpack.c.l.b16 %v73
    %v127 = vunpack.c.h.b16 %v73
    %v128 = vunpack.c.l.b16 %v74
    %v129 = vunpack.c.h.b16 %v74
    %v130 = vunpack.c.l.b16 %v75
    %v131 = vunpack.c.h.b16 %v75
    %v132 = vpack.c.b16 %v110, %v108
    %v133 = vpack.c.b16 %v111, %v109
    %v134 = vpack.c.b16 %v114, %v112
    %v135 = vpack.c.b16 %v115, %v113
    %v136 = vpack.c.b16 %v118, %v116
    %v137 = vpack.c.b16 %v119, %v117
    %v138 = vpack.c.b16 %v122, %v120
    %v139 = vpack.c.b16 %v123, %v121
    %v140 = vpack.c.b16 %v126, %v124
    %v141 = vpack.c.b16 %v127, %v125
    %v142 = vpack.c.b16 %v130, %v128
    %v143 = vpack.c.b16 %v131, %v129
    %vm156 = vcmask 785408
    %v158 = vsel %vm156, %v92, 0
    %v161 = vsel %vm156, %v93, 0
    %v164 = vsel %vm156, %v94, 0
    %v167 = vsel %vm156, %v95, 0
    %169 = vmatprep.subr.bf16.mxu0 %v133
    %170 = vmatpush1.bf16.msra.mxu0 %v132
    %171 = vmatprep.subr.bf16.mxu0 %v135
    %172 = vmatpush1.bf16.msra.mxu0 %v134
    %173 = vmatprep.subr.bf16.mxu0 %v137
    %174 = vmatpush1.bf16.msra.mxu0 %v136
    %175 = vmatprep.subr.bf16.mxu0 %v139
    %176 = vmatpush1.bf16.msra.mxu0 %v138
    %177 = vmatprep.subr.bf16.mxu0 %v141
    %178 = vmatpush1.bf16.msra.mxu0 %v140
    %179 = vmatprep.subr.bf16.mxu0 %v143
    %180 = vmatpush1.bf16.msra.mxu0 %v142
    %181 = vmatprep.subr.bf16.mxu0 0
    %182 = vmatpush1.bf16.msra.mxu0 0
    %183 = vmatprep.subr.bf16.mxu0 0
    %184 = vmatpush1.bf16.msra.mxu0 0
    %185 = vmatprep.subr.bf16.mxu0 0
    %186 = vmatpush1.bf16.msra.mxu0 0
    %187 = vmatprep.subr.bf16.mxu0 0
    %188 = vmatpush1.bf16.msra.mxu0 0
    %189 = vmatprep.subr.bf16.mxu0 0
    %190 = vmatpush1.bf16.msra.mxu0 0
    %191 = vmatprep.subr.bf16.mxu0 0
    %192 = vmatpush1.bf16.msra.mxu0 0
    %193 = vmatprep.subr.bf16.mxu0 0
    %194 = vmatpush1.bf16.msra.mxu0 0
    %195 = vmatprep.subr.bf16.mxu0 0
    %196 = vmatpush1.bf16.msra.mxu0 0
    %197 = vmatprep.subr.bf16.mxu0 0
    %198 = vmatpush1.bf16.msra.mxu0 0
    %199 = vmatprep.subr.bf16.mxu0 0
    %200 = vmatpush1.bf16.msra.mxu0 0
    %201 = vmatprep.mubr.bf16.mxu0 0
    %202 = vmatmul.mubr.bf16.gmra.mrb[0].mxu0 %v158
    %v203 = vpop.f32.mrb[0].mxu0
    %v204 = vadd.f32 0.0, %v203
    %v205 = vpop.f32.mrb[0].mxu0
    %v206 = vadd.f32 0.0, %v205
    %v207 = vpop.f32.mrb[0].mxu0
    %v208 = vadd.f32 0.0, %v207
    %v209 = vpop.f32.mrb[0].mxu0
    %v210 = vadd.f32 0.0, %v209
    %211 = vmatprep.mubr.bf16.mxu0 0
    %212 = vmatmul.mubr.bf16.gmra.mrb[0].mxu0 %v161
    %v213 = vpop.f32.mrb[0].mxu0
    %v214 = vadd.f32 0.0, %v213
    %v215 = vpop.f32.mrb[0].mxu0
    %v216 = vadd.f32 0.0, %v215
    %v217 = vpop.f32.mrb[0].mxu0
    %v218 = vadd.f32 0.0, %v217
    %v219 = vpop.f32.mrb[0].mxu0
    %v220 = vadd.f32 0.0, %v219
    %221 = vmatprep.mubr.bf16.mxu0 0
    %222 = vmatmul.mubr.bf16.gmra.mrb[0].mxu0 %v164
    %v223 = vpop.f32.mrb[0].mxu0
    %v224 = vadd.f32 0.0, %v223
    %v225 = vpop.f32.mrb[0].mxu0
    %v226 = vadd.f32 0.0, %v225
    %v227 = vpop.f32.mrb[0].mxu0
    %v228 = vadd.f32 0.0, %v227
    %v229 = vpop.f32.mrb[0].mxu0
    %v230 = vadd.f32 0.0, %v229
    %231 = vmatprep.mubr.bf16.mxu0 0
    %232 = vmatmul.mubr.bf16.gmra.mrb[0].mxu0 %v167
    %v233 = vpop.f32.mrb[0].mxu0
    %v234 = vadd.f32 0.0, %v233
    %v235 = vpop.f32.mrb[0].mxu0
    %v236 = vadd.f32 0.0, %v235
    %v237 = vpop.f32.mrb[0].mxu0
    %v238 = vadd.f32 0.0, %v237
    %v239 = vpop.f32.mrb[0].mxu0
    %v240 = vadd.f32 0.0, %v239
    %241 = vdwg.mxu0
    %v250 = vunpack.c.l.b16 %v34
    %v251 = vunpack.c.l.b16 %v35
    %v252 = vunpack.c.l.b16 %v36
    %v253 = vunpack.c.l.b16 %v37
    %v254 = vunpack.c.l.b16 %v38
    %v255 = vunpack.c.l.b16 %v39
    %v256 = vunpack.c.l.b16 %v40
    %v257 = vunpack.c.l.b16 %v41
    %v258 = vpack.c.b16 %v251, %v250
    %v259 = vpack.c.b16 %v253, %v252
    %v260 = vpack.c.b16 %v255, %v254
    %v261 = vpack.c.b16 %v257, %v256
    %v274 = vunpack.c.l.b16 %v42
    %v275 = vunpack.c.h.b16 %v42
    %v276 = vunpack.c.l.b16 %v43
    %v277 = vunpack.c.h.b16 %v43
    %v278 = vunpack.c.l.b16 %v44
    %v279 = vunpack.c.h.b16 %v44
    %v280 = vunpack.c.l.b16 %v45
    %v281 = vunpack.c.h.b16 %v45
    %v282 = vunpack.c.l.b16 %v46
    %v283 = vunpack.c.h.b16 %v46
    %v284 = vunpack.c.l.b16 %v47
    %v285 = vunpack.c.h.b16 %v47
    %v286 = vunpack.c.l.b16 %v48
    %v287 = vunpack.c.h.b16 %v48
    %v288 = vunpack.c.l.b16 %v49
    %v289 = vunpack.c.h.b16 %v49
    %v290 = vunpack.c.l.b16 %v50
    %v291 = vunpack.c.h.b16 %v50
    %v292 = vunpack.c.l.b16 %v51
    %v293 = vunpack.c.h.b16 %v51
    %v294 = vunpack.c.l.b16 %v52
    %v295 = vunpack.c.h.b16 %v52
    %v296 = vunpack.c.l.b16 %v53
    %v297 = vunpack.c.h.b16 %v53
    %v298 = vpack.c.b16 %v276, %v274
    %v299 = vpack.c.b16 %v277, %v275
    %v300 = vpack.c.b16 %v280, %v278
    %v301 = vpack.c.b16 %v281, %v279
    %v302 = vpack.c.b16 %v284, %v282
    %v303 = vpack.c.b16 %v285, %v283
    %v304 = vpack.c.b16 %v288, %v286
    %v305 = vpack.c.b16 %v289, %v287
    %v306 = vpack.c.b16 %v292, %v290
    %v307 = vpack.c.b16 %v293, %v291
    %v308 = vpack.c.b16 %v296, %v294
    %v309 = vpack.c.b16 %v297, %v295
    %v323 = vsel %vm156, %v258, 0
    %v326 = vsel %vm156, %v259, 0
    %v329 = vsel %vm156, %v260, 0
    %v332 = vsel %vm156, %v261, 0
    %334 = vmatprep.subr.bf16.mxu0 %v299
    %335 = vmatpush1.bf16.msra.mxu0 %v298
    %336 = vmatprep.subr.bf16.mxu0 %v301
    %337 = vmatpush1.bf16.msra.mxu0 %v300
    %338 = vmatprep.subr.bf16.mxu0 %v303
    %339 = vmatpush1.bf16.msra.mxu0 %v302
    %340 = vmatprep.subr.bf16.mxu0 %v305
    %341 = vmatpush1.bf16.msra.mxu0 %v304
    %342 = vmatprep.subr.bf16.mxu0 %v307
    %343 = vmatpush1.bf16.msra.mxu0 %v306
    %344 = vmatprep.subr.bf16.mxu0 %v309
    %345 = vmatpush1.bf16.msra.mxu0 %v308
    %346 = vmatprep.subr.bf16.mxu0 0
    %347 = vmatpush1.bf16.msra.mxu0 0
    %348 = vmatprep.subr.bf16.mxu0 0
    %349 = vmatpush1.bf16.msra.mxu0 0
    %350 = vmatprep.subr.bf16.mxu0 0
    %351 = vmatpush1.bf16.msra.mxu0 0
    %352 = vmatprep.subr.bf16.mxu0 0
    %353 = vmatpush1.bf16.msra.mxu0 0
    %354 = vmatprep.subr.bf16.mxu0 0
    %355 = vmatpush1.bf16.msra.mxu0 0
    %356 = vmatprep.subr.bf16.mxu0 0
    %357 = vmatpush1.bf16.msra.mxu0 0
    %358 = vmatprep.subr.bf16.mxu0 0
    %359 = vmatpush1.bf16.msra.mxu0 0
    %360 = vmatprep.subr.bf16.mxu0 0
    %361 = vmatpush1.bf16.msra.mxu0 0
    %362 = vmatprep.subr.bf16.mxu0 0
    %363 = vmatpush1.bf16.msra.mxu0 0
    %364 = vmatprep.subr.bf16.mxu0 0
    %365 = vmatpush1.bf16.msra.mxu0 0
    %366 = vmatprep.mubr.bf16.mxu0 0
    %367 = vmatmul.mubr.bf16.gmra.mrb[0].mxu0 %v323
    %v368 = vpop.f32.mrb[0].mxu0
    %v369 = vadd.f32 %v204, %v368
    %v370 = vpop.f32.mrb[0].mxu0
    %v371 = vadd.f32 %v206, %v370
    %v372 = vpop.f32.mrb[0].mxu0
    %v373 = vadd.f32 %v208, %v372
    %v374 = vpop.f32.mrb[0].mxu0
    %v375 = vadd.f32 %v210, %v374
    %376 = vmatprep.mubr.bf16.mxu0 0
    %377 = vmatmul.mubr.bf16.gmra.mrb[0].mxu0 %v326
    %v378 = vpop.f32.mrb[0].mxu0
    %v379 = vadd.f32 %v214, %v378
    %v380 = vpop.f32.mrb[0].mxu0
    %v381 = vadd.f32 %v216, %v380
    %v382 = vpop.f32.mrb[0].mxu0
    %v383 = vadd.f32 %v218, %v382
    %v384 = vpop.f32.mrb[0].mxu0
    %v385 = vadd.f32 %v220, %v384
    %386 = vmatprep.mubr.bf16.mxu0 0
    %387 = vmatmul.mubr.bf16.gmra.mrb[0].mxu0 %v329
    %v388 = vpop.f32.mrb[0].mxu0
    %v389 = vadd.f32 %v224, %v388
    %v390 = vpop.f32.mrb[0].mxu0
    %v391 = vadd.f32 %v226, %v390
    %v392 = vpop.f32.mrb[0].mxu0
    %v393 = vadd.f32 %v228, %v392
    %v394 = vpop.f32.mrb[0].mxu0
    %v395 = vadd.f32 %v230, %v394
    %396 = vmatprep.mubr.bf16.mxu0 0
    %397 = vmatmul.mubr.bf16.gmra.mrb[0].mxu0 %v332
    %v398 = vpop.f32.mrb[0].mxu0
    %v399 = vadd.f32 %v234, %v398
    %v400 = vpop.f32.mrb[0].mxu0
    %v401 = vadd.f32 %v236, %v400
    %v402 = vpop.f32.mrb[0].mxu0
    %v403 = vadd.f32 %v238, %v402
    %v404 = vpop.f32.mrb[0].mxu0
    %v405 = vadd.f32 %v240, %v404
    %406 = vdwg.mxu0
    %s407 = scalar_lea.vmem %s0, 64
    %v408 = vld [vmem:[%s407] sm:$0xf]
    %v409 = vld [vmem:[%s407 + $0x4] sm:$0xf]
    %v410 = vld [vmem:[%s407 + $0x8] sm:$0xf]
    %v411 = vld [vmem:[%s407 + $0xc] sm:$0xf]
    %v412 = vld [vmem:[%s407 + $0x10] sm:$0xf]
    %v413 = vld [vmem:[%s407 + $0x14] sm:$0xf]
    %v414 = vld [vmem:[%s407 + $0x18] sm:$0xf]
    %v415 = vld [vmem:[%s407 + $0x1c] sm:$0xf]
    %s416 = scalar_lea.vmem %s1, 192
    %v417 = vld [vmem:[%s416] sm:$0xff]
    %v418 = vld [vmem:[%s416 + $0x8] sm:$0xff]
    %v419 = vld [vmem:[%s416 + $0x10] sm:$0xff]
    %v420 = vld [vmem:[%s416 + $0x18] sm:$0xff]
    %v421 = vld [vmem:[%s416 + $0x20] sm:$0xff]
    %v422 = vld [vmem:[%s416 + $0x28] sm:$0xff]
    %v423 = vld [vmem:[%s416 + $0x30] sm:$0xff]
    %v424 = vld [vmem:[%s416 + $0x38] sm:$0xff]
    %v425 = vld [vmem:[%s416 + $0x40] sm:$0xff]
    %v426 = vld [vmem:[%s416 + $0x48] sm:$0xff]
    %v427 = vld [vmem:[%s416 + $0x50] sm:$0xff]
    %v428 = vld [vmem:[%s416 + $0x58] sm:$0xff]
    %v437 = vunpack.c.l.b16 %v408
    %v438 = vunpack.c.l.b16 %v409
    %v439 = vunpack.c.l.b16 %v410
    %v440 = vunpack.c.l.b16 %v411
    %v441 = vunpack.c.l.b16 %v412
    %v442 = vunpack.c.l.b16 %v413
    %v443 = vunpack.c.l.b16 %v414
    %v444 = vunpack.c.l.b16 %v415
    %v445 = vpack.c.b16 %v438, %v437
    %v446 = vpack.c.b16 %v440, %v439
    %v447 = vpack.c.b16 %v442, %v441
    %v448 = vpack.c.b16 %v444, %v443
    %v461 = vunpack.c.l.b16 %v417
    %v462 = vunpack.c.h.b16 %v417
    %v463 = vunpack.c.l.b16 %v418
    %v464 = vunpack.c.h.b16 %v418
    %v465 = vunpack.c.l.b16 %v419
    %v466 = vunpack.c.h.b16 %v419
    %v467 = vunpack.c.l.b16 %v420
    %v468 = vunpack.c.h.b16 %v420
    %v469 = vunpack.c.l.b16 %v421
    %v470 = vunpack.c.h.b16 %v421
    %v471 = vunpack.c.l.b16 %v422
    %v472 = vunpack.c.h.b16 %v422
    %v473 = vunpack.c.l.b16 %v423
    %v474 = vunpack.c.h.b16 %v423
    %v475 = vunpack.c.l.b16 %v424
    %v476 = vunpack.c.h.b16 %v424
    %v477 = vunpack.c.l.b16 %v425
    %v478 = vunpack.c.h.b16 %v425
    %v479 = vunpack.c.l.b16 %v426
    %v480 = vunpack.c.h.b16 %v426
    %v481 = vunpack.c.l.b16 %v427
    %v482 = vunpack.c.h.b16 %v427
    %v483 = vunpack.c.l.b16 %v428
    %v484 = vunpack.c.h.b16 %v428
    %v485 = vpack.c.b16 %v463, %v461
    %v486 = vpack.c.b16 %v464, %v462
    %v487 = vpack.c.b16 %v467, %v465
    %v488 = vpack.c.b16 %v468, %v466
    %v489 = vpack.c.b16 %v471, %v469
    %v490 = vpack.c.b16 %v472, %v470
    %v491 = vpack.c.b16 %v475, %v473
    %v492 = vpack.c.b16 %v476, %v474
    %v493 = vpack.c.b16 %v479, %v477
    %v494 = vpack.c.b16 %v480, %v478
    %v495 = vpack.c.b16 %v483, %v481
    %v496 = vpack.c.b16 %v484, %v482
    %v510 = vsel %vm156, %v445, 0
    %v513 = vsel %vm156, %v446, 0
    %v516 = vsel %vm156, %v447, 0
    %v519 = vsel %vm156, %v448, 0
    %521 = vmatprep.subr.bf16.mxu0 %v486
    %522 = vmatpush1.bf16.msra.mxu0 %v485
    %523 = vmatprep.subr.bf16.mxu0 %v488
    %524 = vmatpush1.bf16.msra.mxu0 %v487
    %525 = vmatprep.subr.bf16.mxu0 %v490
    %526 = vmatpush1.bf16.msra.mxu0 %v489
    %527 = vmatprep.subr.bf16.mxu0 %v492
    %528 = vmatpush1.bf16.msra.mxu0 %v491
    %529 = vmatprep.subr.bf16.mxu0 %v494
    %530 = vmatpush1.bf16.msra.mxu0 %v493
    %531 = vmatprep.subr.bf16.mxu0 %v496
    %532 = vmatpush1.bf16.msra.mxu0 %v495
    %533 = vmatprep.subr.bf16.mxu0 0
    %534 = vmatpush1.bf16.msra.mxu0 0
    %535 = vmatprep.subr.bf16.mxu0 0
    %536 = vmatpush1.bf16.msra.mxu0 0
    %537 = vmatprep.subr.bf16.mxu0 0
    %538 = vmatpush1.bf16.msra.mxu0 0
    %539 = vmatprep.subr.bf16.mxu0 0
    %540 = vmatpush1.bf16.msra.mxu0 0
    %541 = vmatprep.subr.bf16.mxu0 0
    %542 = vmatpush1.bf16.msra.mxu0 0
    %543 = vmatprep.subr.bf16.mxu0 0
    %544 = vmatpush1.bf16.msra.mxu0 0
    %545 = vmatprep.subr.bf16.mxu0 0
    %546 = vmatpush1.bf16.msra.mxu0 0
    %547 = vmatprep.subr.bf16.mxu0 0
    %548 = vmatpush1.bf16.msra.mxu0 0
    %549 = vmatprep.subr.bf16.mxu0 0
    %550 = vmatpush1.bf16.msra.mxu0 0
    %551 = vmatprep.subr.bf16.mxu0 0
    %552 = vmatpush1.bf16.msra.mxu0 0
    %553 = vmatprep.mubr.bf16.mxu0 0
    %554 = vmatmul.mubr.bf16.gmra.mrb[0].mxu0 %v510
    %v555 = vpop.f32.mrb[0].mxu0
    %v556 = vadd.f32 0.0, %v555
    %v557 = vpop.f32.mrb[0].mxu0
    %v558 = vadd.f32 0.0, %v557
    %v559 = vpop.f32.mrb[0].mxu0
    %v560 = vadd.f32 0.0, %v559
    %v561 = vpop.f32.mrb[0].mxu0
    %v562 = vadd.f32 0.0, %v561
    %563 = vmatprep.mubr.bf16.mxu0 0
    %564 = vmatmul.mubr.bf16.gmra.mrb[0].mxu0 %v513
    %v565 = vpop.f32.mrb[0].mxu0
    %v566 = vadd.f32 0.0, %v565
    %v567 = vpop.f32.mrb[0].mxu0
    %v568 = vadd.f32 0.0, %v567
    %v569 = vpop.f32.mrb[0].mxu0
    %v570 = vadd.f32 0.0, %v569
    %v571 = vpop.f32.mrb[0].mxu0
    %v572 = vadd.f32 0.0, %v571
    %573 = vmatprep.mubr.bf16.mxu0 0
    %574 = vmatmul.mubr.bf16.gmra.mrb[0].mxu0 %v516
    %v575 = vpop.f32.mrb[0].mxu0
    %v576 = vadd.f32 0.0, %v575
    %v577 = vpop.f32.mrb[0].mxu0
    %v578 = vadd.f32 0.0, %v577
    %v579 = vpop.f32.mrb[0].mxu0
    %v580 = vadd.f32 0.0, %v579
    %v581 = vpop.f32.mrb[0].mxu0
    %v582 = vadd.f32 0.0, %v581
    %583 = vmatprep.mubr.bf16.mxu0 0
    %584 = vmatmul.mubr.bf16.gmra.mrb[0].mxu0 %v519
    %v585 = vpop.f32.mrb[0].mxu0
    %v586 = vadd.f32 0.0, %v585
    %v587 = vpop.f32.mrb[0].mxu0
    %v588 = vadd.f32 0.0, %v587
    %v589 = vpop.f32.mrb[0].mxu0
    %v590 = vadd.f32 0.0, %v589
    %v591 = vpop.f32.mrb[0].mxu0
    %v592 = vadd.f32 0.0, %v591
    %593 = vdwg.mxu0
    %v594 = vadd.f32 %v369, %v556
    %v595 = vadd.f32 %v371, %v558
    %v596 = vadd.f32 %v373, %v560
    %v597 = vadd.f32 %v375, %v562
    %v598 = vadd.f32 %v379, %v566
    %v599 = vadd.f32 %v381, %v568
    %v600 = vadd.f32 %v383, %v570
    %v601 = vadd.f32 %v385, %v572
    %v602 = vadd.f32 %v389, %v576
    %v603 = vadd.f32 %v391, %v578
    %v604 = vadd.f32 %v393, %v580
    %v605 = vadd.f32 %v395, %v582
    %v606 = vadd.f32 %v399, %v586
    %v607 = vadd.f32 %v401, %v588
    %v608 = vadd.f32 %v403, %v590
    %v609 = vadd.f32 %v405, %v592
    %v611 = vlaneseq
    %v612 = vshrl.u32 %v611, 7
    %v613 = vsub.s32 0, %v612
    %v614 = vrot.slane %v28, %v613
    %v615 = vlaneseq
    %v616 = vshrl.u32 %v615, 7
    %v617 = vsub.s32 1, %v616
    %v618 = vrot.slane %v28, %v617
    %v621 = vadd.f32 %v594, %v614
    %v622 = vadd.f32 %v595, %v618
    %v623 = vadd.f32 %v596, %v614
    %v624 = vadd.f32 %v597, %v618
    %v625 = vadd.f32 %v598, %v614
    %v626 = vadd.f32 %v599, %v618
    %v627 = vadd.f32 %v600, %v614
    %v628 = vadd.f32 %v601, %v618
    %v629 = vadd.f32 %v602, %v614
    %v630 = vadd.f32 %v603, %v618
    %v631 = vadd.f32 %v604, %v614
    %v632 = vadd.f32 %v605, %v618
    %v633 = vadd.f32 %v606, %v614
    %v634 = vadd.f32 %v607, %v618
    %v635 = vadd.f32 %v608, %v614
    %v636 = vadd.f32 %v609, %v618
    %v637 = vmax.f32 %v621, %v622
    %v638 = vmax.f32 %v623, %v624
    %v639 = vmax.f32 %v625, %v626
    %v640 = vmax.f32 %v627, %v628
    %v641 = vmax.f32 %v629, %v630
    %v642 = vmax.f32 %v631, %v632
    %v643 = vmax.f32 %v633, %v634
    %v644 = vmax.f32 %v635, %v636
    %645 = vst [vmem:[#allocation2] sm:$0xff] %v637
    %646 = vst [vmem:[#allocation2 + $0x8] sm:$0xff] %v638
    %647 = vst [vmem:[#allocation2 + $0x10] sm:$0xff] %v639
    %648 = vst [vmem:[#allocation2 + $0x18] sm:$0xff] %v640
    %649 = vst [vmem:[#allocation2 + $0x20] sm:$0xff] %v641
    %650 = vst [vmem:[#allocation2 + $0x28] sm:$0xff] %v642
    %651 = vst [vmem:[#allocation2 + $0x30] sm:$0xff] %v643
    %652 = vst [vmem:[#allocation2 + $0x38] sm:$0xff] %v644
    %v653 = vld [vmem:[#allocation2] ss:$2 sm:$0xff]
    %s654 = scalar_lea.vmem [#allocation2], 16
    %v655 = vld [vmem:[%s654] ss:$2 sm:$0xff]
    %s656 = scalar_lea.vmem [#allocation2], 32
    %v657 = vld [vmem:[%s656] ss:$2 sm:$0xff]
    %s658 = scalar_lea.vmem [#allocation2], 48
    %v659 = vld [vmem:[%s658] ss:$2 sm:$0xff]
    %s660 = scalar_lea.vmem [#allocation2], 1
    %v661 = vld [vmem:[%s660] ss:$2 sm:$0xff]
    %s662 = scalar_lea.vmem [#allocation2], 17
    %v663 = vld [vmem:[%s662] ss:$2 sm:$0xff]
    %s664 = scalar_lea.vmem [#allocation2], 33
    %v665 = vld [vmem:[%s664] ss:$2 sm:$0xff]
    %s666 = scalar_lea.vmem [#allocation2], 49
    %v667 = vld [vmem:[%s666] ss:$2 sm:$0xff]
    %v668 = vmax.f32 %v653, %v661
    %v669 = vmax.f32 %v655, %v663
    %v670 = vmax.f32 %v657, %v665
    %v671 = vmax.f32 %v659, %v667
    %v672 = vmax.f32 %v668, 0.0
    %v673 = vmax.f32 %v669, 0.0
    %v674 = vmax.f32 %v670, 0.0
    %v675 = vmax.f32 %v671, 0.0
    %676 = vst [vmem:[#allocation3] sm:$0xff] %v672
    %677 = vst [vmem:[#allocation3 + $0x8] sm:$0xff] %v673
    %678 = vst [vmem:[#allocation3 + $0x10] sm:$0xff] %v674
    %679 = vst [vmem:[#allocation3 + $0x18] sm:$0xff] %v675
    %680 = vst [vmem:[#allocation3 + $0x20] sm:$0xff] 0.0
    %v681 = vld [vmem:[#allocation3] sm:$0xff]
    %v682 = vld [vmem:[#allocation3 + $0x8] sm:$0xff]
    %v683 = vld [vmem:[#allocation3 + $0x10] sm:$0xff]
    %v684 = vld [vmem:[#allocation3 + $0x18] sm:$0xff]
    %v685 = vpack.c.bf16 %v682, %v681
    %v686 = vpack.c.bf16 %v684, %v683
    %v687 = vld [vmem:[%s2] sm:$0xff]
    %v688 = vld [vmem:[%s2 + $0x8] sm:$0xff]
    %v689 = vld [vmem:[%s2 + $0x10] sm:$0xff]
    %v690 = vld [vmem:[%s2 + $0x18] sm:$0xff]
    %v691 = vld [vmem:[%s2 + $0x20] sm:$0xff]
    %v692 = vld [vmem:[%s2 + $0x28] sm:$0xff]
    %v693 = vld [vmem:[%s2 + $0x30] sm:$0xff]
    %v694 = vld [vmem:[%s2 + $0x38] sm:$0xff]
    %v695 = vld [vmem:[%s2 + $0x40] sm:$0xff]
    %v696 = vld [vmem:[%s2 + $0x48] sm:$0xff]
    %v697 = vld [vmem:[%s2 + $0x50] sm:$0xff]
    %v698 = vld [vmem:[%s2 + $0x58] sm:$0xff]
    %v699 = vld [vmem:[%s2 + $0x60] sm:$0xff]
    %v700 = vld [vmem:[%s2 + $0x68] sm:$0xff]
    %v701 = vld [vmem:[%s2 + $0x70] sm:$0xff]
    %v702 = vld [vmem:[%s2 + $0x78] sm:$0xff]
    %v703 = vld [vmem:[#allocation3 + $0x1] sm:$0xff]
    %v704 = vld [vmem:[#allocation3 + $0x9] sm:$0xff]
    %v705 = vld [vmem:[#allocation3 + $0x11] sm:$0xff]
    %v706 = vld [vmem:[#allocation3 + $0x19] sm:$0xff]
    %v707 = vpack.c.bf16 %v704, %v703
    %v708 = vpack.c.bf16 %v706, %v705
    %s709 = scalar_lea.vmem %s2, 128
    %v710 = vld [vmem:[%s709] sm:$0xff]
    %v711 = vld [vmem:[%s709 + $0x8] sm:$0xff]
    %v712 = vld [vmem:[%s709 + $0x10] sm:$0xff]
    %v713 = vld [vmem:[%s709 + $0x18] sm:$0xff]
    %v714 = vld [vmem:[%s709 + $0x20] sm:$0xff]
    %v715 = vld [vmem:[%s709 + $0x28] sm:$0xff]
    %v716 = vld [vmem:[%s709 + $0x30] sm:$0xff]
    %v717 = vld [vmem:[%s709 + $0x38] sm:$0xff]
    %v718 = vld [vmem:[%s709 + $0x40] sm:$0xff]
    %v719 = vld [vmem:[%s709 + $0x48] sm:$0xff]
    %v720 = vld [vmem:[%s709 + $0x50] sm:$0xff]
    %v721 = vld [vmem:[%s709 + $0x58] sm:$0xff]
    %v722 = vld [vmem:[%s709 + $0x60] sm:$0xff]
    %v723 = vld [vmem:[%s709 + $0x68] sm:$0xff]
    %v724 = vld [vmem:[%s709 + $0x70] sm:$0xff]
    %v725 = vld [vmem:[%s709 + $0x78] sm:$0xff]
    %v742 = vunpack.c.l.b16 %v710
    %v743 = vunpack.c.h.b16 %v710
    %v744 = vunpack.c.l.b16 %v711
    %v745 = vunpack.c.h.b16 %v711
    %v746 = vunpack.c.l.b16 %v712
    %v747 = vunpack.c.h.b16 %v712
    %v748 = vunpack.c.l.b16 %v713
    %v749 = vunpack.c.h.b16 %v713
    %v750 = vunpack.c.l.b16 %v714
    %v751 = vunpack.c.h.b16 %v714
    %v752 = vunpack.c.l.b16 %v715
    %v753 = vunpack.c.h.b16 %v715
    %v754 = vunpack.c.l.b16 %v716
    %v755 = vunpack.c.h.b16 %v716
    %v756 = vunpack.c.l.b16 %v717
    %v757 = vunpack.c.h.b16 %v717
    %v758 = vunpack.c.l.b16 %v718
    %v759 = vunpack.c.h.b16 %v718
    %v760 = vunpack.c.l.b16 %v719
    %v761 = vunpack.c.h.b16 %v719
    %v762 = vunpack.c.l.b16 %v720
    %v763 = vunpack.c.h.b16 %v720
    %v764 = vunpack.c.l.b16 %v721
    %v765 = vunpack.c.h.b16 %v721
    %v766 = vunpack.c.l.b16 %v722
    %v767 = vunpack.c.h.b16 %v722
    %v768 = vunpack.c.l.b16 %v723
    %v769 = vunpack.c.h.b16 %v723
    %v770 = vunpack.c.l.b16 %v724
    %v771 = vunpack.c.h.b16 %v724
    %v772 = vunpack.c.l.b16 %v725
    %v773 = vunpack.c.h.b16 %v725
    %v774 = vpack.c.b16 %v744, %v742
    %v775 = vpack.c.b16 %v745, %v743
    %v776 = vpack.c.b16 %v748, %v746
    %v777 = vpack.c.b16 %v749, %v747
    %v778 = vpack.c.b16 %v752, %v750
    %v779 = vpack.c.b16 %v753, %v751
    %v780 = vpack.c.b16 %v756, %v754
    %v781 = vpack.c.b16 %v757, %v755
    %v782 = vpack.c.b16 %v760, %v758
    %v783 = vpack.c.b16 %v761, %v759
    %v784 = vpack.c.b16 %v764, %v762
    %v785 = vpack.c.b16 %v765, %v763
    %v786 = vpack.c.b16 %v768, %v766
    %v787 = vpack.c.b16 %v769, %v767
    %v788 = vpack.c.b16 %v772, %v770
    %v789 = vpack.c.b16 %v773, %v771
    %806 = vmatprep.subr.bf16.mxu0 %v775
    %807 = vmatpush1.bf16.msra.mxu0 %v774
    %808 = vmatprep.subr.bf16.mxu0 %v777
    %809 = vmatpush1.bf16.msra.mxu0 %v776
    %810 = vmatprep.subr.bf16.mxu0 %v779
    %811 = vmatpush1.bf16.msra.mxu0 %v778
    %812 = vmatprep.subr.bf16.mxu0 %v781
    %813 = vmatpush1.bf16.msra.mxu0 %v780
    %814 = vmatprep.subr.bf16.mxu0 %v783
    %815 = vmatpush1.bf16.msra.mxu0 %v782
    %816 = vmatprep.subr.bf16.mxu0 %v785
    %817 = vmatpush1.bf16.msra.mxu0 %v784
    %818 = vmatprep.subr.bf16.mxu0 %v787
    %819 = vmatpush1.bf16.msra.mxu0 %v786
    %820 = vmatprep.subr.bf16.mxu0 %v789
    %821 = vmatpush1.bf16.msra.mxu0 %v788
    %822 = vmatprep.subr.bf16.mxu0 0
    %823 = vmatpush1.bf16.msra.mxu0 0
    %824 = vmatprep.subr.bf16.mxu0 0
    %825 = vmatpush1.bf16.msra.mxu0 0
    %826 = vmatprep.subr.bf16.mxu0 0
    %827 = vmatpush1.bf16.msra.mxu0 0
    %828 = vmatprep.subr.bf16.mxu0 0
    %829 = vmatpush1.bf16.msra.mxu0 0
    %830 = vmatprep.subr.bf16.mxu0 0
    %831 = vmatpush1.bf16.msra.mxu0 0
    %832 = vmatprep.subr.bf16.mxu0 0
    %833 = vmatpush1.bf16.msra.mxu0 0
    %834 = vmatprep.subr.bf16.mxu0 0
    %835 = vmatpush1.bf16.msra.mxu0 0
    %836 = vmatprep.subr.bf16.mxu0 0
    %837 = vmatpush1.bf16.msra.mxu0 0
    %838 = vmatprep.mubr.bf16.mxu0 0
    %839 = vmatmul.mubr.bf16.gmra.mrb[0].mxu0 %v707
    %v840 = vpop.f32.mrb[0].mxu0
    %v841 = vadd.f32 0.0, %v840
    %v842 = vpop.f32.mrb[0].mxu0
    %v843 = vadd.f32 0.0, %v842
    %v844 = vpop.f32.mrb[0].mxu0
    %v845 = vadd.f32 0.0, %v844
    %v846 = vpop.f32.mrb[0].mxu0
    %v847 = vadd.f32 0.0, %v846
    %848 = vmatprep.mubr.bf16.mxu0 0
    %849 = vmatmul.mubr.bf16.gmra.mrb[0].mxu0 %v708
    %v850 = vpop.f32.mrb[0].mxu0
    %v851 = vadd.f32 0.0, %v850
    %v852 = vpop.f32.mrb[0].mxu0
    %v853 = vadd.f32 0.0, %v852
    %v854 = vpop.f32.mrb[0].mxu0
    %v855 = vadd.f32 0.0, %v854
    %v856 = vpop.f32.mrb[0].mxu0
    %v857 = vadd.f32 0.0, %v856
    %858 = vdwg.mxu0
    %v875 = vunpack.c.l.b16 %v687
    %v876 = vunpack.c.h.b16 %v687
    %v877 = vunpack.c.l.b16 %v688
    %v878 = vunpack.c.h.b16 %v688
    %v879 = vunpack.c.l.b16 %v689
    %v880 = vunpack.c.h.b16 %v689
    %v881 = vunpack.c.l.b16 %v690
    %v882 = vunpack.c.h.b16 %v690
    %v883 = vunpack.c.l.b16 %v691
    %v884 = vunpack.c.h.b16 %v691
    %v885 = vunpack.c.l.b16 %v692
    %v886 = vunpack.c.h.b16 %v692
    %v887 = vunpack.c.l.b16 %v693
    %v888 = vunpack.c.h.b16 %v693
    %v889 = vunpack.c.l.b16 %v694
    %v890 = vunpack.c.h.b16 %v694
    %v891 = vunpack.c.l.b16 %v695
    %v892 = vunpack.c.h.b16 %v695
    %v893 = vunpack.c.l.b16 %v696
    %v894 = vunpack.c.h.b16 %v696
    %v895 = vunpack.c.l.b16 %v697
    %v896 = vunpack.c.h.b16 %v697
    %v897 = vunpack.c.l.b16 %v698
    %v898 = vunpack.c.h.b16 %v698
    %v899 = vunpack.c.l.b16 %v699
    %v900 = vunpack.c.h.b16 %v699
    %v901 = vunpack.c.l.b16 %v700
    %v902 = vunpack.c.h.b16 %v700
    %v903 = vunpack.c.l.b16 %v701
    %v904 = vunpack.c.h.b16 %v701
    %v905 = vunpack.c.l.b16 %v702
    %v906 = vunpack.c.h.b16 %v702
    %v907 = vpack.c.b16 %v877, %v875
    %v908 = vpack.c.b16 %v878, %v876
    %v909 = vpack.c.b16 %v881, %v879
    %v910 = vpack.c.b16 %v882, %v880
    %v911 = vpack.c.b16 %v885, %v883
    %v912 = vpack.c.b16 %v886, %v884
    %v913 = vpack.c.b16 %v889, %v887
    %v914 = vpack.c.b16 %v890, %v888
    %v915 = vpack.c.b16 %v893, %v891
    %v916 = vpack.c.b16 %v894, %v892
    %v917 = vpack.c.b16 %v897, %v895
    %v918 = vpack.c.b16 %v898, %v896
    %v919 = vpack.c.b16 %v901, %v899
    %v920 = vpack.c.b16 %v902, %v900
    %v921 = vpack.c.b16 %v905, %v903
    %v922 = vpack.c.b16 %v906, %v904
    %939 = vmatprep.subr.bf16.mxu0 %v908
    %940 = vmatpush1.bf16.msra.mxu0 %v907
    %941 = vmatprep.subr.bf16.mxu0 %v910
    %942 = vmatpush1.bf16.msra.mxu0 %v909
    %943 = vmatprep.subr.bf16.mxu0 %v912
    %944 = vmatpush1.bf16.msra.mxu0 %v911
    %945 = vmatprep.subr.bf16.mxu0 %v914
    %946 = vmatpush1.bf16.msra.mxu0 %v913
    %947 = vmatprep.subr.bf16.mxu0 %v916
    %948 = vmatpush1.bf16.msra.mxu0 %v915
    %949 = vmatprep.subr.bf16.mxu0 %v918
    %950 = vmatpush1.bf16.msra.mxu0 %v917
    %951 = vmatprep.subr.bf16.mxu0 %v920
    %952 = vmatpush1.bf16.msra.mxu0 %v919
    %953 = vmatprep.subr.bf16.mxu0 %v922
    %954 = vmatpush1.bf16.msra.mxu0 %v921
    %955 = vmatprep.subr.bf16.mxu0 0
    %956 = vmatpush1.bf16.msra.mxu0 0
    %957 = vmatprep.subr.bf16.mxu0 0
    %958 = vmatpush1.bf16.msra.mxu0 0
    %959 = vmatprep.subr.bf16.mxu0 0
    %960 = vmatpush1.bf16.msra.mxu0 0
    %961 = vmatprep.subr.bf16.mxu0 0
    %962 = vmatpush1.bf16.msra.mxu0 0
    %963 = vmatprep.subr.bf16.mxu0 0
    %964 = vmatpush1.bf16.msra.mxu0 0
    %965 = vmatprep.subr.bf16.mxu0 0
    %966 = vmatpush1.bf16.msra.mxu0 0
    %967 = vmatprep.subr.bf16.mxu0 0
    %968 = vmatpush1.bf16.msra.mxu0 0
    %969 = vmatprep.subr.bf16.mxu0 0
    %970 = vmatpush1.bf16.msra.mxu0 0
    %971 = vmatprep.mubr.bf16.mxu0 0
    %972 = vmatmul.mubr.bf16.gmra.mrb[0].mxu0 %v685
    %v973 = vpop.f32.mrb[0].mxu0
    %v974 = vadd.f32 %v841, %v973
    %v975 = vpop.f32.mrb[0].mxu0
    %v976 = vadd.f32 %v843, %v975
    %v977 = vpop.f32.mrb[0].mxu0
    %v978 = vadd.f32 %v845, %v977
    %v979 = vpop.f32.mrb[0].mxu0
    %v980 = vadd.f32 %v847, %v979
    %981 = vmatprep.mubr.bf16.mxu0 0
    %982 = vmatmul.mubr.bf16.gmra.mrb[0].mxu0 %v686
    %v983 = vpop.f32.mrb[0].mxu0
    %v984 = vadd.f32 %v851, %v983
    %v985 = vpop.f32.mrb[0].mxu0
    %v986 = vadd.f32 %v853, %v985
    %v987 = vpop.f32.mrb[0].mxu0
    %v988 = vadd.f32 %v855, %v987
    %v989 = vpop.f32.mrb[0].mxu0
    %v990 = vadd.f32 %v857, %v989
    %991 = vdwg.mxu0
    %v992 = vld [vmem:[#allocation3 + $0x2] sm:$0xff]
    %v993 = vld [vmem:[#allocation3 + $0xa] sm:$0xff]
    %v994 = vld [vmem:[#allocation3 + $0x12] sm:$0xff]
    %v995 = vld [vmem:[#allocation3 + $0x1a] sm:$0xff]
    %v996 = vpack.c.bf16 %v993, %v992
    %v997 = vpack.c.bf16 %v995, %v994
    %s998 = scalar_lea.vmem %s2, 256
    %v999 = vld [vmem:[%s998] sm:$0xff]
    %v1000 = vld [vmem:[%s998 + $0x8] sm:$0xff]
    %v1001 = vld [vmem:[%s998 + $0x10] sm:$0xff]
    %v1002 = vld [vmem:[%s998 + $0x18] sm:$0xff]
    %v1003 = vld [vmem:[%s998 + $0x20] sm:$0xff]
    %v1004 = vld [vmem:[%s998 + $0x28] sm:$0xff]
    %v1005 = vld [vmem:[%s998 + $0x30] sm:$0xff]
    %v1006 = vld [vmem:[%s998 + $0x38] sm:$0xff]
    %v1007 = vld [vmem:[%s998 + $0x40] sm:$0xff]
    %v1008 = vld [vmem:[%s998 + $0x48] sm:$0xff]
    %v1009 = vld [vmem:[%s998 + $0x50] sm:$0xff]
    %v1010 = vld [vmem:[%s998 + $0x58] sm:$0xff]
    %v1011 = vld [vmem:[%s998 + $0x60] sm:$0xff]
    %v1012 = vld [vmem:[%s998 + $0x68] sm:$0xff]
    %v1013 = vld [vmem:[%s998 + $0x70] sm:$0xff]
    %v1014 = vld [vmem:[%s998 + $0x78] sm:$0xff]
    %v1031 = vunpack.c.l.b16 %v999
    %v1032 = vunpack.c.h.b16 %v999
    %v1033 = vunpack.c.l.b16 %v1000
    %v1034 = vunpack.c.h.b16 %v1000
    %v1035 = vunpack.c.l.b16 %v1001
    %v1036 = vunpack.c.h.b16 %v1001
    %v1037 = vunpack.c.l.b16 %v1002
    %v1038 = vunpack.c.h.b16 %v1002
    %v1039 = vunpack.c.l.b16 %v1003
    %v1040 = vunpack.c.h.b16 %v1003
    %v1041 = vunpack.c.l.b16 %v1004
    %v1042 = vunpack.c.h.b16 %v1004
    %v1043 = vunpack.c.l.b16 %v1005
    %v1044 = vunpack.c.h.b16 %v1005
    %v1045 = vunpack.c.l.b16 %v1006
    %v1046 = vunpack.c.h.b16 %v1006
    %v1047 = vunpack.c.l.b16 %v1007
    %v1048 = vunpack.c.h.b16 %v1007
    %v1049 = vunpack.c.l.b16 %v1008
    %v1050 = vunpack.c.h.b16 %v1008
    %v1051 = vunpack.c.l.b16 %v1009
    %v1052 = vunpack.c.h.b16 %v1009
    %v1053 = vunpack.c.l.b16 %v1010
    %v1054 = vunpack.c.h.b16 %v1010
    %v1055 = vunpack.c.l.b16 %v1011
    %v1056 = vunpack.c.h.b16 %v1011
    %v1057 = vunpack.c.l.b16 %v1012
    %v1058 = vunpack.c.h.b16 %v1012
    %v1059 = vunpack.c.l.b16 %v1013
    %v1060 = vunpack.c.h.b16 %v1013
    %v1061 = vunpack.c.l.b16 %v1014
    %v1062 = vunpack.c.h.b16 %v1014
    %v1063 = vpack.c.b16 %v1033, %v1031
    %v1064 = vpack.c.b16 %v1034, %v1032
    %v1065 = vpack.c.b16 %v1037, %v1035
    %v1066 = vpack.c.b16 %v1038, %v1036
    %v1067 = vpack.c.b16 %v1041, %v1039
    %v1068 = vpack.c.b16 %v1042, %v1040
    %v1069 = vpack.c.b16 %v1045, %v1043
    %v1070 = vpack.c.b16 %v1046, %v1044
    %v1071 = vpack.c.b16 %v1049, %v1047
    %v1072 = vpack.c.b16 %v1050, %v1048
    %v1073 = vpack.c.b16 %v1053, %v1051
    %v1074 = vpack.c.b16 %v1054, %v1052
    %v1075 = vpack.c.b16 %v1057, %v1055
    %v1076 = vpack.c.b16 %v1058, %v1056
    %v1077 = vpack.c.b16 %v1061, %v1059
    %v1078 = vpack.c.b16 %v1062, %v1060
    %1095 = vmatprep.subr.bf16.mxu0 %v1064
    %1096 = vmatpush1.bf16.msra.mxu0 %v1063
    %1097 = vmatprep.subr.bf16.mxu0 %v1066
    %1098 = vmatpush1.bf16.msra.mxu0 %v1065
    %1099 = vmatprep.subr.bf16.mxu0 %v1068
    %1100 = vmatpush1.bf16.msra.mxu0 %v1067
    %1101 = vmatprep.subr.bf16.mxu0 %v1070
    %1102 = vmatpush1.bf16.msra.mxu0 %v1069
    %1103 = vmatprep.subr.bf16.mxu0 %v1072
    %1104 = vmatpush1.bf16.msra.mxu0 %v1071
    %1105 = vmatprep.subr.bf16.mxu0 %v1074
    %1106 = vmatpush1.bf16.msra.mxu0 %v1073
    %1107 = vmatprep.subr.bf16.mxu0 %v1076
    %1108 = vmatpush1.bf16.msra.mxu0 %v1075
    %1109 = vmatprep.subr.bf16.mxu0 %v1078
    %1110 = vmatpush1.bf16.msra.mxu0 %v1077
    %1111 = vmatprep.subr.bf16.mxu0 0
    %1112 = vmatpush1.bf16.msra.mxu0 0
    %1113 = vmatprep.subr.bf16.mxu0 0
    %1114 = vmatpush1.bf16.msra.mxu0 0
    %1115 = vmatprep.subr.bf16.mxu0 0
    %1116 = vmatpush1.bf16.msra.mxu0 0
    %1117 = vmatprep.subr.bf16.mxu0 0
    %1118 = vmatpush1.bf16.msra.mxu0 0
    %1119 = vmatprep.subr.bf16.mxu0 0
    %1120 = vmatpush1.bf16.msra.mxu0 0
    %1121 = vmatprep.subr.bf16.mxu0 0
    %1122 = vmatpush1.bf16.msra.mxu0 0
    %1123 = vmatprep.subr.bf16.mxu0 0
    %1124 = vmatpush1.bf16.msra.mxu0 0
    %1125 = vmatprep.subr.bf16.mxu0 0
    %1126 = vmatpush1.bf16.msra.mxu0 0
    %1127 = vmatprep.mubr.bf16.mxu0 0
    %1128 = vmatmul.mubr.bf16.gmra.mrb[0].mxu0 %v996
    %v1129 = vpop.f32.mrb[0].mxu0
    %v1130 = vadd.f32 0.0, %v1129
    %v1131 = vpop.f32.mrb[0].mxu0
    %v1132 = vadd.f32 0.0, %v1131
    %v1133 = vpop.f32.mrb[0].mxu0
    %v1134 = vadd.f32 0.0, %v1133
    %v1135 = vpop.f32.mrb[0].mxu0
    %v1136 = vadd.f32 0.0, %v1135
    %1137 = vmatprep.mubr.bf16.mxu0 0
    %1138 = vmatmul.mubr.bf16.gmra.mrb[0].mxu0 %v997
    %v1139 = vpop.f32.mrb[0].mxu0
    %v1140 = vadd.f32 0.0, %v1139
    %v1141 = vpop.f32.mrb[0].mxu0
    %v1142 = vadd.f32 0.0, %v1141
    %v1143 = vpop.f32.mrb[0].mxu0
    %v1144 = vadd.f32 0.0, %v1143
    %v1145 = vpop.f32.mrb[0].mxu0
    %v1146 = vadd.f32 0.0, %v1145
    %1147 = vdwg.mxu0
    %v1148 = vadd.f32 %v974, %v1130
    %v1149 = vadd.f32 %v976, %v1132
    %v1150 = vadd.f32 %v978, %v1134
    %v1151 = vadd.f32 %v980, %v1136
    %v1152 = vadd.f32 %v984, %v1140
    %v1153 = vadd.f32 %v986, %v1142
    %v1154 = vadd.f32 %v988, %v1144
    %v1155 = vadd.f32 %v990, %v1146
    %v1157 = vlaneseq
    %v1158 = vshrl.u32 %v1157, 7
    %v1159 = vsub.s32 0, %v1158
    %v1160 = vrot.slane %v30, %v1159
    %v1161 = vlaneseq
    %v1162 = vshrl.u32 %v1161, 7
    %v1163 = vsub.s32 1, %v1162
    %v1164 = vrot.slane %v30, %v1163
    %v1167 = vadd.f32 %v1148, %v1160
    %v1168 = vadd.f32 %v1149, %v1164
    %v1169 = vadd.f32 %v1150, %v1160
    %v1170 = vadd.f32 %v1151, %v1164
    %v1171 = vadd.f32 %v1152, %v1160
    %v1172 = vadd.f32 %v1153, %v1164
    %v1173 = vadd.f32 %v1154, %v1160
    %v1174 = vadd.f32 %v1155, %v1164
    %v1175 = vmax.f32 %v1167, %v1168
    %v1176 = vmax.f32 %v1169, %v1170
    %v1177 = vmax.f32 %v1171, %v1172
    %v1178 = vmax.f32 %v1173, %v1174
    %1179 = vst [vmem:[#allocation4] sm:$0xff] %v1175
    %1180 = vst [vmem:[#allocation4 + $0x8] sm:$0xff] %v1176
    %1181 = vst [vmem:[#allocation4 + $0x10] sm:$0xff] %v1177
    %1182 = vst [vmem:[#allocation4 + $0x18] sm:$0xff] %v1178
    %v1183 = vld [vmem:[#allocation4] ss:$16 sm:$0x3]
    %s1184 = scalar_lea.vmem [#allocation4], 1
    %v1185 = vld [vmem:[%s1184] ss:$16 sm:$0x3]
    %v1186 = vmax.f32 %v1183, %v1185
    %v1187 = vmax.f32 %v1186, 0.0
    %v1188 = vpack.c.bf16 %v1187, %v1187
    %v1189 = vld [vmem:[%s3] sm:$0xf]
    %v1190 = vld [vmem:[%s3 + $0x4] sm:$0xf]
    %v1191 = vld [vmem:[%s3 + $0x8] sm:$0xf]
    %v1192 = vld [vmem:[%s3 + $0xc] sm:$0xf]
    %v1193 = vld [vmem:[%s3 + $0x10] sm:$0xf]
    %v1194 = vld [vmem:[%s3 + $0x14] sm:$0xf]
    %v1195 = vld [vmem:[%s3 + $0x18] sm:$0xf]
    %v1196 = vld [vmem:[%s3 + $0x1c] sm:$0xf]
    %v1197 = vld [vmem:[%s3 + $0x20] sm:$0xf]
    %v1198 = vld [vmem:[%s3 + $0x24] sm:$0xf]
    %v1199 = vld [vmem:[%s3 + $0x28] sm:$0xf]
    %v1200 = vld [vmem:[%s3 + $0x2c] sm:$0xf]
    %v1201 = vld [vmem:[%s3 + $0x30] sm:$0xf]
    %v1202 = vld [vmem:[%s3 + $0x34] sm:$0xf]
    %v1203 = vld [vmem:[%s3 + $0x38] sm:$0xf]
    %v1204 = vld [vmem:[%s3 + $0x3c] sm:$0xf]
    %s1205 = scalar_lea.vmem [#allocation4], 2
    %v1206 = vld [vmem:[%s1205] ss:$16 sm:$0x3]
    %s1207 = scalar_lea.vmem [#allocation4], 3
    %v1208 = vld [vmem:[%s1207] ss:$16 sm:$0x3]
    %v1209 = vmax.f32 %v1206, %v1208
    %v1210 = vmax.f32 %v1209, 0.0
    %v1211 = vpack.c.bf16 %v1210, %v1210
    %s1212 = scalar_lea.vmem %s3, 64
    %v1213 = vld [vmem:[%s1212] sm:$0xf]
    %v1214 = vld [vmem:[%s1212 + $0x4] sm:$0xf]
    %v1215 = vld [vmem:[%s1212 + $0x8] sm:$0xf]
    %v1216 = vld [vmem:[%s1212 + $0xc] sm:$0xf]
    %v1217 = vld [vmem:[%s1212 + $0x10] sm:$0xf]
    %v1218 = vld [vmem:[%s1212 + $0x14] sm:$0xf]
    %v1219 = vld [vmem:[%s1212 + $0x18] sm:$0xf]
    %v1220 = vld [vmem:[%s1212 + $0x1c] sm:$0xf]
    %v1221 = vld [vmem:[%s1212 + $0x20] sm:$0xf]
    %v1222 = vld [vmem:[%s1212 + $0x24] sm:$0xf]
    %v1223 = vld [vmem:[%s1212 + $0x28] sm:$0xf]
    %v1224 = vld [vmem:[%s1212 + $0x2c] sm:$0xf]
    %v1225 = vld [vmem:[%s1212 + $0x30] sm:$0xf]
    %v1226 = vld [vmem:[%s1212 + $0x34] sm:$0xf]
    %v1227 = vld [vmem:[%s1212 + $0x38] sm:$0xf]
    %v1228 = vld [vmem:[%s1212 + $0x3c] sm:$0xf]
    %v1245 = vunpack.c.l.b16 %v1213
    %v1246 = vunpack.c.l.b16 %v1214
    %v1247 = vunpack.c.l.b16 %v1215
    %v1248 = vunpack.c.l.b16 %v1216
    %v1249 = vunpack.c.l.b16 %v1217
    %v1250 = vunpack.c.l.b16 %v1218
    %v1251 = vunpack.c.l.b16 %v1219
    %v1252 = vunpack.c.l.b16 %v1220
    %v1253 = vunpack.c.l.b16 %v1221
    %v1254 = vunpack.c.l.b16 %v1222
    %v1255 = vunpack.c.l.b16 %v1223
    %v1256 = vunpack.c.l.b16 %v1224
    %v1257 = vunpack.c.l.b16 %v1225
    %v1258 = vunpack.c.l.b16 %v1226
    %v1259 = vunpack.c.l.b16 %v1227
    %v1260 = vunpack.c.l.b16 %v1228
    %v1261 = vpack.c.b16 %v1246, %v1245
    %v1262 = vpack.c.b16 %v1248, %v1247
    %v1263 = vpack.c.b16 %v1250, %v1249
    %v1264 = vpack.c.b16 %v1252, %v1251
    %v1265 = vpack.c.b16 %v1254, %v1253
    %v1266 = vpack.c.b16 %v1256, %v1255
    %v1267 = vpack.c.b16 %v1258, %v1257
    %v1268 = vpack.c.b16 %v1260, %v1259
    %1277 = vmatprep.subr.bf16.mxu0 0
    %1278 = vmatpush1.bf16.msra.mxu0 %v1261
    %1279 = vmatprep.subr.bf16.mxu0 0
    %1280 = vmatpush1.bf16.msra.mxu0 %v1262
    %1281 = vmatprep.subr.bf16.mxu0 0
    %1282 = vmatpush1.bf16.msra.mxu0 %v1263
    %1283 = vmatprep.subr.bf16.mxu0 0
    %1284 = vmatpush1.bf16.msra.mxu0 %v1264
    %1285 = vmatprep.subr.bf16.mxu0 0
    %1286 = vmatpush1.bf16.msra.mxu0 %v1265
    %1287 = vmatprep.subr.bf16.mxu0 0
    %1288 = vmatpush1.bf16.msra.mxu0 %v1266
    %1289 = vmatprep.subr.bf16.mxu0 0
    %1290 = vmatpush1.bf16.msra.mxu0 %v1267
    %1291 = vmatprep.subr.bf16.mxu0 0
    %1292 = vmatpush1.bf16.msra.mxu0 %v1268
    %1293 = vmatprep.subr.bf16.mxu0 0
    %1294 = vmatpush1.bf16.msra.mxu0 0
    %1295 = vmatprep.subr.bf16.mxu0 0
    %1296 = vmatpush1.bf16.msra.mxu0 0
    %1297 = vmatprep.subr.bf16.mxu0 0
    %1298 = vmatpush1.bf16.msra.mxu0 0
    %1299 = vmatprep.subr.bf16.mxu0 0
    %1300 = vmatpush1.bf16.msra.mxu0 0
    %1301 = vmatprep.subr.bf16.mxu0 0
    %1302 = vmatpush1.bf16.msra.mxu0 0
    %1303 = vmatprep.subr.bf16.mxu0 0
    %1304 = vmatpush1.bf16.msra.mxu0 0
    %1305 = vmatprep.subr.bf16.mxu0 0
    %1306 = vmatpush1.bf16.msra.mxu0 0
    %1307 = vmatprep.subr.bf16.mxu0 0
    %1308 = vmatpush1.bf16.msra.mxu0 0
    %1309 = vmatprep.mubr.bf16.mxu0 0
    %1310 = vmatmul.mubr.bf16.gmra.mrb[0].mxu0 %v1211
    %v1311 = vpop.f32.mrb[0].mxu0
    %v1312 = vadd.f32 0.0, %v1311
    %v1313 = vpop.f32.mrb[0].mxu0
    %v1314 = vpop.f32.mrb[0].mxu0
    %v1315 = vpop.f32.mrb[0].mxu0
    %1316 = vdwg.mxu0
    %v1333 = vunpack.c.l.b16 %v1189
    %v1334 = vunpack.c.l.b16 %v1190
    %v1335 = vunpack.c.l.b16 %v1191
    %v1336 = vunpack.c.l.b16 %v1192
    %v1337 = vunpack.c.l.b16 %v1193
    %v1338 = vunpack.c.l.b16 %v1194
    %v1339 = vunpack.c.l.b16 %v1195
    %v1340 = vunpack.c.l.b16 %v1196
    %v1341 = vunpack.c.l.b16 %v1197
    %v1342 = vunpack.c.l.b16 %v1198
    %v1343 = vunpack.c.l.b16 %v1199
    %v1344 = vunpack.c.l.b16 %v1200
    %v1345 = vunpack.c.l.b16 %v1201
    %v1346 = vunpack.c.l.b16 %v1202
    %v1347 = vunpack.c.l.b16 %v1203
    %v1348 = vunpack.c.l.b16 %v1204
    %v1349 = vpack.c.b16 %v1334, %v1333
    %v1350 = vpack.c.b16 %v1336, %v1335
    %v1351 = vpack.c.b16 %v1338, %v1337
    %v1352 = vpack.c.b16 %v1340, %v1339
    %v1353 = vpack.c.b16 %v1342, %v1341
    %v1354 = vpack.c.b16 %v1344, %v1343
    %v1355 = vpack.c.b16 %v1346, %v1345
    %v1356 = vpack.c.b16 %v1348, %v1347
    %1365 = vmatprep.subr.bf16.mxu0 0
    %1366 = vmatpush1.bf16.msra.mxu0 %v1349
    %1367 = vmatprep.subr.bf16.mxu0 0
    %1368 = vmatpush1.bf16.msra.mxu0 %v1350
    %1369 = vmatprep.subr.bf16.mxu0 0
    %1370 = vmatpush1.bf16.msra.mxu0 %v1351
    %1371 = vmatprep.subr.bf16.mxu0 0
    %1372 = vmatpush1.bf16.msra.mxu0 %v1352
    %1373 = vmatprep.subr.bf16.mxu0 0
    %1374 = vmatpush1.bf16.msra.mxu0 %v1353
    %1375 = vmatprep.subr.bf16.mxu0 0
    %1376 = vmatpush1.bf16.msra.mxu0 %v1354
    %1377 = vmatprep.subr.bf16.mxu0 0
    %1378 = vmatpush1.bf16.msra.mxu0 %v1355
    %1379 = vmatprep.subr.bf16.mxu0 0
    %1380 = vmatpush1.bf16.msra.mxu0 %v1356
    %1381 = vmatprep.subr.bf16.mxu0 0
    %1382 = vmatpush1.bf16.msra.mxu0 0
    %1383 = vmatprep.subr.bf16.mxu0 0
    %1384 = vmatpush1.bf16.msra.mxu0 0
    %1385 = vmatprep.subr.bf16.mxu0 0
    %1386 = vmatpush1.bf16.msra.mxu0 0
    %1387 = vmatprep.subr.bf16.mxu0 0
    %1388 = vmatpush1.bf16.msra.mxu0 0
    %1389 = vmatprep.subr.bf16.mxu0 0
    %1390 = vmatpush1.bf16.msra.mxu0 0
    %1391 = vmatprep.subr.bf16.mxu0 0
    %1392 = vmatpush1.bf16.msra.mxu0 0
    %1393 = vmatprep.subr.bf16.mxu0 0
    %1394 = vmatpush1.bf16.msra.mxu0 0
    %1395 = vmatprep.subr.bf16.mxu0 0
    %1396 = vmatpush1.bf16.msra.mxu0 0
    %1397 = vmatprep.mubr.bf16.mxu0 0
    %1398 = vmatmul.mubr.bf16.gmra.mrb[0].mxu0 %v1188
    %v1399 = vpop.f32.mrb[0].mxu0
    %v1400 = vadd.f32 %v1312, %v1399
    %v1401 = vpop.f32.mrb[0].mxu0
    %v1402 = vpop.f32.mrb[0].mxu0
    %v1403 = vpop.f32.mrb[0].mxu0
    %1404 = vdwg.mxu0
    %s1405 = scalar_lea.vmem [#allocation4], 4
    %v1406 = vld [vmem:[%s1405] ss:$16 sm:$0x3]
    %s1407 = scalar_lea.vmem [#allocation4], 5
    %v1408 = vld [vmem:[%s1407] ss:$16 sm:$0x3]
    %v1409 = vmax.f32 %v1406, %v1408
    %v1410 = vmax.f32 %v1409, 0.0
    %v1411 = vpack.c.bf16 %v1410, %v1410
    %s1412 = scalar_lea.vmem %s3, 128
    %v1413 = vld [vmem:[%s1412] sm:$0xf]
    %v1414 = vld [vmem:[%s1412 + $0x4] sm:$0xf]
    %v1415 = vld [vmem:[%s1412 + $0x8] sm:$0xf]
    %v1416 = vld [vmem:[%s1412 + $0xc] sm:$0xf]
    %v1417 = vld [vmem:[%s1412 + $0x10] sm:$0xf]
    %v1418 = vld [vmem:[%s1412 + $0x14] sm:$0xf]
    %v1419 = vld [vmem:[%s1412 + $0x18] sm:$0xf]
    %v1420 = vld [vmem:[%s1412 + $0x1c] sm:$0xf]
    %v1421 = vld [vmem:[%s1412 + $0x20] sm:$0xf]
    %v1422 = vld [vmem:[%s1412 + $0x24] sm:$0xf]
    %v1423 = vld [vmem:[%s1412 + $0x28] sm:$0xf]
    %v1424 = vld [vmem:[%s1412 + $0x2c] sm:$0xf]
    %v1425 = vld [vmem:[%s1412 + $0x30] sm:$0xf]
    %v1426 = vld [vmem:[%s1412 + $0x34] sm:$0xf]
    %v1427 = vld [vmem:[%s1412 + $0x38] sm:$0xf]
    %v1428 = vld [vmem:[%s1412 + $0x3c] sm:$0xf]
    %v1445 = vunpack.c.l.b16 %v1413
    %v1446 = vunpack.c.l.b16 %v1414
    %v1447 = vunpack.c.l.b16 %v1415
    %v1448 = vunpack.c.l.b16 %v1416
    %v1449 = vunpack.c.l.b16 %v1417
    %v1450 = vunpack.c.l.b16 %v1418
    %v1451 = vunpack.c.l.b16 %v1419
    %v1452 = vunpack.c.l.b16 %v1420
    %v1453 = vunpack.c.l.b16 %v1421
    %v1454 = vunpack.c.l.b16 %v1422
    %v1455 = vunpack.c.l.b16 %v1423
    %v1456 = vunpack.c.l.b16 %v1424
    %v1457 = vunpack.c.l.b16 %v1425
    %v1458 = vunpack.c.l.b16 %v1426
    %v1459 = vunpack.c.l.b16 %v1427
    %v1460 = vunpack.c.l.b16 %v1428
    %v1461 = vpack.c.b16 %v1446, %v1445
    %v1462 = vpack.c.b16 %v1448, %v1447
    %v1463 = vpack.c.b16 %v1450, %v1449
    %v1464 = vpack.c.b16 %v1452, %v1451
    %v1465 = vpack.c.b16 %v1454, %v1453
    %v1466 = vpack.c.b16 %v1456, %v1455
    %v1467 = vpack.c.b16 %v1458, %v1457
    %v1468 = vpack.c.b16 %v1460, %v1459
    %1477 = vmatprep.subr.bf16.mxu0 0
    %1478 = vmatpush1.bf16.msra.mxu0 %v1461
    %1479 = vmatprep.subr.bf16.mxu0 0
    %1480 = vmatpush1.bf16.msra.mxu0 %v1462
    %1481 = vmatprep.subr.bf16.mxu0 0
    %1482 = vmatpush1.bf16.msra.mxu0 %v1463
    %1483 = vmatprep.subr.bf16.mxu0 0
    %1484 = vmatpush1.bf16.msra.mxu0 %v1464
    %1485 = vmatprep.subr.bf16.mxu0 0
    %1486 = vmatpush1.bf16.msra.mxu0 %v1465
    %1487 = vmatprep.subr.bf16.mxu0 0
    %1488 = vmatpush1.bf16.msra.mxu0 %v1466
    %1489 = vmatprep.subr.bf16.mxu0 0
    %1490 = vmatpush1.bf16.msra.mxu0 %v1467
    %1491 = vmatprep.subr.bf16.mxu0 0
    %1492 = vmatpush1.bf16.msra.mxu0 %v1468
    %1493 = vmatprep.subr.bf16.mxu0 0
    %1494 = vmatpush1.bf16.msra.mxu0 0
    %1495 = vmatprep.subr.bf16.mxu0 0
    %1496 = vmatpush1.bf16.msra.mxu0 0
    %1497 = vmatprep.subr.bf16.mxu0 0
    %1498 = vmatpush1.bf16.msra.mxu0 0
    %1499 = vmatprep.subr.bf16.mxu0 0
    %1500 = vmatpush1.bf16.msra.mxu0 0
    %1501 = vmatprep.subr.bf16.mxu0 0
    %1502 = vmatpush1.bf16.msra.mxu0 0
    %1503 = vmatprep.subr.bf16.mxu0 0
    %1504 = vmatpush1.bf16.msra.mxu0 0
    %1505 = vmatprep.subr.bf16.mxu0 0
    %1506 = vmatpush1.bf16.msra.mxu0 0
    %1507 = vmatprep.subr.bf16.mxu0 0
    %1508 = vmatpush1.bf16.msra.mxu0 0
    %1509 = vmatprep.mubr.bf16.mxu0 0
    %1510 = vmatmul.mubr.bf16.gmra.mrb[0].mxu0 %v1411
    %v1511 = vpop.f32.mrb[0].mxu0
    %v1512 = vadd.f32 0.0, %v1511
    %v1513 = vpop.f32.mrb[0].mxu0
    %v1514 = vpop.f32.mrb[0].mxu0
    %v1515 = vpop.f32.mrb[0].mxu0
    %1516 = vdwg.mxu0
    %v1517 = vadd.f32 %v1400, %v1512
    %s1518 = scalar_lea.vmem [#allocation4], 6
    %v1519 = vld [vmem:[%s1518] ss:$16 sm:$0x3]
    %s1520 = scalar_lea.vmem [#allocation4], 7
    %v1521 = vld [vmem:[%s1520] ss:$16 sm:$0x3]
    %v1522 = vmax.f32 %v1519, %v1521
    %v1523 = vmax.f32 %v1522, 0.0
    %v1524 = vpack.c.bf16 %v1523, %v1523
    %s1525 = scalar_lea.vmem %s3, 192
    %v1526 = vld [vmem:[%s1525] sm:$0xf]
    %v1527 = vld [vmem:[%s1525 + $0x4] sm:$0xf]
    %v1528 = vld [vmem:[%s1525 + $0x8] sm:$0xf]
    %v1529 = vld [vmem:[%s1525 + $0xc] sm:$0xf]
    %v1530 = vld [vmem:[%s1525 + $0x10] sm:$0xf]
    %v1531 = vld [vmem:[%s1525 + $0x14] sm:$0xf]
    %v1532 = vld [vmem:[%s1525 + $0x18] sm:$0xf]
    %v1533 = vld [vmem:[%s1525 + $0x1c] sm:$0xf]
    %v1534 = vld [vmem:[%s1525 + $0x20] sm:$0xf]
    %v1535 = vld [vmem:[%s1525 + $0x24] sm:$0xf]
    %v1536 = vld [vmem:[%s1525 + $0x28] sm:$0xf]
    %v1537 = vld [vmem:[%s1525 + $0x2c] sm:$0xf]
    %v1538 = vld [vmem:[%s1525 + $0x30] sm:$0xf]
    %v1539 = vld [vmem:[%s1525 + $0x34] sm:$0xf]
    %v1540 = vld [vmem:[%s1525 + $0x38] sm:$0xf]
    %v1541 = vld [vmem:[%s1525 + $0x3c] sm:$0xf]
    %v1558 = vunpack.c.l.b16 %v1526
    %v1559 = vunpack.c.l.b16 %v1527
    %v1560 = vunpack.c.l.b16 %v1528
    %v1561 = vunpack.c.l.b16 %v1529
    %v1562 = vunpack.c.l.b16 %v1530
    %v1563 = vunpack.c.l.b16 %v1531
    %v1564 = vunpack.c.l.b16 %v1532
    %v1565 = vunpack.c.l.b16 %v1533
    %v1566 = vunpack.c.l.b16 %v1534
    %v1567 = vunpack.c.l.b16 %v1535
    %v1568 = vunpack.c.l.b16 %v1536
    %v1569 = vunpack.c.l.b16 %v1537
    %v1570 = vunpack.c.l.b16 %v1538
    %v1571 = vunpack.c.l.b16 %v1539
    %v1572 = vunpack.c.l.b16 %v1540
    %v1573 = vunpack.c.l.b16 %v1541
    %v1574 = vpack.c.b16 %v1559, %v1558
    %v1575 = vpack.c.b16 %v1561, %v1560
    %v1576 = vpack.c.b16 %v1563, %v1562
    %v1577 = vpack.c.b16 %v1565, %v1564
    %v1578 = vpack.c.b16 %v1567, %v1566
    %v1579 = vpack.c.b16 %v1569, %v1568
    %v1580 = vpack.c.b16 %v1571, %v1570
    %v1581 = vpack.c.b16 %v1573, %v1572
    %1590 = vmatprep.subr.bf16.mxu0 0
    %1591 = vmatpush1.bf16.msra.mxu0 %v1574
    %1592 = vmatprep.subr.bf16.mxu0 0
    %1593 = vmatpush1.bf16.msra.mxu0 %v1575
    %1594 = vmatprep.subr.bf16.mxu0 0
    %1595 = vmatpush1.bf16.msra.mxu0 %v1576
    %1596 = vmatprep.subr.bf16.mxu0 0
    %1597 = vmatpush1.bf16.msra.mxu0 %v1577
    %1598 = vmatprep.subr.bf16.mxu0 0
    %1599 = vmatpush1.bf16.msra.mxu0 %v1578
    %1600 = vmatprep.subr.bf16.mxu0 0
    %1601 = vmatpush1.bf16.msra.mxu0 %v1579
    %1602 = vmatprep.subr.bf16.mxu0 0
    %1603 = vmatpush1.bf16.msra.mxu0 %v1580
    %1604 = vmatprep.subr.bf16.mxu0 0
    %1605 = vmatpush1.bf16.msra.mxu0 %v1581
    %1606 = vmatprep.subr.bf16.mxu0 0
    %1607 = vmatpush1.bf16.msra.mxu0 0
    %1608 = vmatprep.subr.bf16.mxu0 0
    %1609 = vmatpush1.bf16.msra.mxu0 0
    %1610 = vmatprep.subr.bf16.mxu0 0
    %1611 = vmatpush1.bf16.msra.mxu0 0
    %1612 = vmatprep.subr.bf16.mxu0 0
    %1613 = vmatpush1.bf16.msra.mxu0 0
    %1614 = vmatprep.subr.bf16.mxu0 0
    %1615 = vmatpush1.bf16.msra.mxu0 0
    %1616 = vmatprep.subr.bf16.mxu0 0
    %1617 = vmatpush1.bf16.msra.mxu0 0
    %1618 = vmatprep.subr.bf16.mxu0 0
    %1619 = vmatpush1.bf16.msra.mxu0 0
    %1620 = vmatprep.subr.bf16.mxu0 0
    %1621 = vmatpush1.bf16.msra.mxu0 0
    %1622 = vmatprep.mubr.bf16.mxu0 0
    %1623 = vmatmul.mubr.bf16.gmra.mrb[0].mxu0 %v1524
    %v1624 = vpop.f32.mrb[0].mxu0
    %v1625 = vadd.f32 0.0, %v1624
    %v1626 = vpop.f32.mrb[0].mxu0
    %v1627 = vpop.f32.mrb[0].mxu0
    %v1628 = vpop.f32.mrb[0].mxu0
    %1629 = vdwg.mxu0
    %v1630 = vadd.f32 %v1517, %v1625
    %s1631 = scalar_lea.vmem [#allocation4], 8
    %v1632 = vld [vmem:[%s1631] ss:$16 sm:$0x3]
    %s1633 = scalar_lea.vmem [#allocation4], 9
    %v1634 = vld [vmem:[%s1633] ss:$16 sm:$0x3]
    %v1635 = vmax.f32 %v1632, %v1634
    %v1636 = vmax.f32 %v1635, 0.0
    %v1637 = vpack.c.bf16 %v1636, %v1636
    %s1638 = scalar_lea.vmem %s3, 256
    %v1639 = vld [vmem:[%s1638] sm:$0xf]
    %v1640 = vld [vmem:[%s1638 + $0x4] sm:$0xf]
    %v1641 = vld [vmem:[%s1638 + $0x8] sm:$0xf]
    %v1642 = vld [vmem:[%s1638 + $0xc] sm:$0xf]
    %v1643 = vld [vmem:[%s1638 + $0x10] sm:$0xf]
    %v1644 = vld [vmem:[%s1638 + $0x14] sm:$0xf]
    %v1645 = vld [vmem:[%s1638 + $0x18] sm:$0xf]
    %v1646 = vld [vmem:[%s1638 + $0x1c] sm:$0xf]
    %v1647 = vld [vmem:[%s1638 + $0x20] sm:$0xf]
    %v1648 = vld [vmem:[%s1638 + $0x24] sm:$0xf]
    %v1649 = vld [vmem:[%s1638 + $0x28] sm:$0xf]
    %v1650 = vld [vmem:[%s1638 + $0x2c] sm:$0xf]
    %v1651 = vld [vmem:[%s1638 + $0x30] sm:$0xf]
    %v1652 = vld [vmem:[%s1638 + $0x34] sm:$0xf]
    %v1653 = vld [vmem:[%s1638 + $0x38] sm:$0xf]
    %v1654 = vld [vmem:[%s1638 + $0x3c] sm:$0xf]
    %v1671 = vunpack.c.l.b16 %v1639
    %v1672 = vunpack.c.l.b16 %v1640
    %v1673 = vunpack.c.l.b16 %v1641
    %v1674 = vunpack.c.l.b16 %v1642
    %v1675 = vunpack.c.l.b16 %v1643
    %v1676 = vunpack.c.l.b16 %v1644
    %v1677 = vunpack.c.l.b16 %v1645
    %v1678 = vunpack.c.l.b16 %v1646
    %v1679 = vunpack.c.l.b16 %v1647
    %v1680 = vunpack.c.l.b16 %v1648
    %v1681 = vunpack.c.l.b16 %v1649
    %v1682 = vunpack.c.l.b16 %v1650
    %v1683 = vunpack.c.l.b16 %v1651
    %v1684 = vunpack.c.l.b16 %v1652
    %v1685 = vunpack.c.l.b16 %v1653
    %v1686 = vunpack.c.l.b16 %v1654
    %v1687 = vpack.c.b16 %v1672, %v1671
    %v1688 = vpack.c.b16 %v1674, %v1673
    %v1689 = vpack.c.b16 %v1676, %v1675
    %v1690 = vpack.c.b16 %v1678, %v1677
    %v1691 = vpack.c.b16 %v1680, %v1679
    %v1692 = vpack.c.b16 %v1682, %v1681
    %v1693 = vpack.c.b16 %v1684, %v1683
    %v1694 = vpack.c.b16 %v1686, %v1685
    %1703 = vmatprep.subr.bf16.mxu0 0
    %1704 = vmatpush1.bf16.msra.mxu0 %v1687
    %1705 = vmatprep.subr.bf16.mxu0 0
    %1706 = vmatpush1.bf16.msra.mxu0 %v1688
    %1707 = vmatprep.subr.bf16.mxu0 0
    %1708 = vmatpush1.bf16.msra.mxu0 %v1689
    %1709 = vmatprep.subr.bf16.mxu0 0
    %1710 = vmatpush1.bf16.msra.mxu0 %v1690
    %1711 = vmatprep.subr.bf16.mxu0 0
    %1712 = vmatpush1.bf16.msra.mxu0 %v1691
    %1713 = vmatprep.subr.bf16.mxu0 0
    %1714 = vmatpush1.bf16.msra.mxu0 %v1692
    %1715 = vmatprep.subr.bf16.mxu0 0
    %1716 = vmatpush1.bf16.msra.mxu0 %v1693
    %1717 = vmatprep.subr.bf16.mxu0 0
    %1718 = vmatpush1.bf16.msra.mxu0 %v1694
    %1719 = vmatprep.subr.bf16.mxu0 0
    %1720 = vmatpush1.bf16.msra.mxu0 0
    %1721 = vmatprep.subr.bf16.mxu0 0
    %1722 = vmatpush1.bf16.msra.mxu0 0
    %1723 = vmatprep.subr.bf16.mxu0 0
    %1724 = vmatpush1.bf16.msra.mxu0 0
    %1725 = vmatprep.subr.bf16.mxu0 0
    %1726 = vmatpush1.bf16.msra.mxu0 0
    %1727 = vmatprep.subr.bf16.mxu0 0
    %1728 = vmatpush1.bf16.msra.mxu0 0
    %1729 = vmatprep.subr.bf16.mxu0 0
    %1730 = vmatpush1.bf16.msra.mxu0 0
    %1731 = vmatprep.subr.bf16.mxu0 0
    %1732 = vmatpush1.bf16.msra.mxu0 0
    %1733 = vmatprep.subr.bf16.mxu0 0
    %1734 = vmatpush1.bf16.msra.mxu0 0
    %1735 = vmatprep.mubr.bf16.mxu0 0
    %1736 = vmatmul.mubr.bf16.gmra.mrb[0].mxu0 %v1637
    %v1737 = vpop.f32.mrb[0].mxu0
    %v1738 = vadd.f32 0.0, %v1737
    %v1739 = vpop.f32.mrb[0].mxu0
    %v1740 = vpop.f32.mrb[0].mxu0
    %v1741 = vpop.f32.mrb[0].mxu0
    %1742 = vdwg.mxu0
    %v1743 = vadd.f32 %v1630, %v1738
    %s1744 = scalar_lea.vmem [#allocation4], 10
    %v1745 = vld [vmem:[%s1744] ss:$16 sm:$0x3]
    %s1746 = scalar_lea.vmem [#allocation4], 11
    %v1747 = vld [vmem:[%s1746] ss:$16 sm:$0x3]
    %v1748 = vmax.f32 %v1745, %v1747
    %v1749 = vmax.f32 %v1748, 0.0
    %v1750 = vpack.c.bf16 %v1749, %v1749
    %s1751 = scalar_lea.vmem %s3, 320
    %v1752 = vld [vmem:[%s1751] sm:$0xf]
    %v1753 = vld [vmem:[%s1751 + $0x4] sm:$0xf]
    %v1754 = vld [vmem:[%s1751 + $0x8] sm:$0xf]
    %v1755 = vld [vmem:[%s1751 + $0xc] sm:$0xf]
    %v1756 = vld [vmem:[%s1751 + $0x10] sm:$0xf]
    %v1757 = vld [vmem:[%s1751 + $0x14] sm:$0xf]
    %v1758 = vld [vmem:[%s1751 + $0x18] sm:$0xf]
    %v1759 = vld [vmem:[%s1751 + $0x1c] sm:$0xf]
    %v1760 = vld [vmem:[%s1751 + $0x20] sm:$0xf]
    %v1761 = vld [vmem:[%s1751 + $0x24] sm:$0xf]
    %v1762 = vld [vmem:[%s1751 + $0x28] sm:$0xf]
    %v1763 = vld [vmem:[%s1751 + $0x2c] sm:$0xf]
    %v1764 = vld [vmem:[%s1751 + $0x30] sm:$0xf]
    %v1765 = vld [vmem:[%s1751 + $0x34] sm:$0xf]
    %v1766 = vld [vmem:[%s1751 + $0x38] sm:$0xf]
    %v1767 = vld [vmem:[%s1751 + $0x3c] sm:$0xf]
    %v1784 = vunpack.c.l.b16 %v1752
    %v1785 = vunpack.c.l.b16 %v1753
    %v1786 = vunpack.c.l.b16 %v1754
    %v1787 = vunpack.c.l.b16 %v1755
    %v1788 = vunpack.c.l.b16 %v1756
    %v1789 = vunpack.c.l.b16 %v1757
    %v1790 = vunpack.c.l.b16 %v1758
    %v1791 = vunpack.c.l.b16 %v1759
    %v1792 = vunpack.c.l.b16 %v1760
    %v1793 = vunpack.c.l.b16 %v1761
    %v1794 = vunpack.c.l.b16 %v1762
    %v1795 = vunpack.c.l.b16 %v1763
    %v1796 = vunpack.c.l.b16 %v1764
    %v1797 = vunpack.c.l.b16 %v1765
    %v1798 = vunpack.c.l.b16 %v1766
    %v1799 = vunpack.c.l.b16 %v1767
    %v1800 = vpack.c.b16 %v1785, %v1784
    %v1801 = vpack.c.b16 %v1787, %v1786
    %v1802 = vpack.c.b16 %v1789, %v1788
    %v1803 = vpack.c.b16 %v1791, %v1790
    %v1804 = vpack.c.b16 %v1793, %v1792
    %v1805 = vpack.c.b16 %v1795, %v1794
    %v1806 = vpack.c.b16 %v1797, %v1796
    %v1807 = vpack.c.b16 %v1799, %v1798
    %1816 = vmatprep.subr.bf16.mxu0 0
    %1817 = vmatpush1.bf16.msra.mxu0 %v1800
    %1818 = vmatprep.subr.bf16.mxu0 0
    %1819 = vmatpush1.bf16.msra.mxu0 %v1801
    %1820 = vmatprep.subr.bf16.mxu0 0
    %1821 = vmatpush1.bf16.msra.mxu0 %v1802
    %1822 = vmatprep.subr.bf16.mxu0 0
    %1823 = vmatpush1.bf16.msra.mxu0 %v1803
    %1824 = vmatprep.subr.bf16.mxu0 0
    %1825 = vmatpush1.bf16.msra.mxu0 %v1804
    %1826 = vmatprep.subr.bf16.mxu0 0
    %1827 = vmatpush1.bf16.msra.mxu0 %v1805
    %1828 = vmatprep.subr.bf16.mxu0 0
    %1829 = vmatpush1.bf16.msra.mxu0 %v1806
    %1830 = vmatprep.subr.bf16.mxu0 0
    %1831 = vmatpush1.bf16.msra.mxu0 %v1807
    %1832 = vmatprep.subr.bf16.mxu0 0
    %1833 = vmatpush1.bf16.msra.mxu0 0
    %1834 = vmatprep.subr.bf16.mxu0 0
    %1835 = vmatpush1.bf16.msra.mxu0 0
    %1836 = vmatprep.subr.bf16.mxu0 0
    %1837 = vmatpush1.bf16.msra.mxu0 0
    %1838 = vmatprep.subr.bf16.mxu0 0
    %1839 = vmatpush1.bf16.msra.mxu0 0
    %1840 = vmatprep.subr.bf16.mxu0 0
    %1841 = vmatpush1.bf16.msra.mxu0 0
    %1842 = vmatprep.subr.bf16.mxu0 0
    %1843 = vmatpush1.bf16.msra.mxu0 0
    %1844 = vmatprep.subr.bf16.mxu0 0
    %1845 = vmatpush1.bf16.msra.mxu0 0
    %1846 = vmatprep.subr.bf16.mxu0 0
    %1847 = vmatpush1.bf16.msra.mxu0 0
    %1848 = vmatprep.mubr.bf16.mxu0 0
    %1849 = vmatmul.mubr.bf16.gmra.mrb[0].mxu0 %v1750
    %v1850 = vpop.f32.mrb[0].mxu0
    %v1851 = vadd.f32 0.0, %v1850
    %v1852 = vpop.f32.mrb[0].mxu0
    %v1853 = vpop.f32.mrb[0].mxu0
    %v1854 = vpop.f32.mrb[0].mxu0
    %1855 = vdwg.mxu0
    %v1856 = vadd.f32 %v1743, %v1851
    %v1857 = vlaneseq
    %v1858 = vshrl.u32 %v1857, 7
    %v1859 = vsub.s32 0, %v1858
    %v1860 = vrot.slane %v31, %v1859
    %v1861 = vadd.f32 %v1856, %v1860
    %v1862 = vmax.f32 %v1861, 0.0
    %v1863 = vpack.c.bf16 %v1862, %v1862
    %v1864 = vld [vmem:[%s4] sm:$0xf]
    %v1865 = vld [vmem:[%s4 + $0x4] sm:$0xf]
    %v1866 = vld [vmem:[%s4 + $0x8] sm:$0xf]
    %v1867 = vld [vmem:[%s4 + $0xc] sm:$0xf]
    %v1868 = vld [vmem:[%s4 + $0x10] sm:$0xf]
    %v1869 = vld [vmem:[%s4 + $0x14] sm:$0xf]
    %v1870 = vld [vmem:[%s4 + $0x18] sm:$0xf]
    %v1871 = vld [vmem:[%s4 + $0x1c] sm:$0xf]
    %v1872 = vld [vmem:[%s4 + $0x20] sm:$0xf]
    %v1873 = vld [vmem:[%s4 + $0x24] sm:$0xf]
    %v1874 = vld [vmem:[%s4 + $0x28] sm:$0xf]
    %v1875 = vld [vmem:[%s4 + $0x2c] sm:$0xf]
    %v1876 = vld [vmem:[%s4 + $0x30] sm:$0xf]
    %v1877 = vld [vmem:[%s4 + $0x34] sm:$0xf]
    %v1878 = vld [vmem:[%s4 + $0x38] sm:$0xf]
    %v1879 = vld [vmem:[%s4 + $0x3c] sm:$0xf]
    %v1880 = vlaneseq
    %v1881 = vshrl.u32 %v1880, 7
    %v1882 = vsub.s32 0, %v1881
    %v1883 = vrot.slane %v32, %v1882
    %v1900 = vunpack.c.l.b16 %v1864
    %v1901 = vunpack.c.l.b16 %v1865
    %v1902 = vunpack.c.l.b16 %v1866
    %v1903 = vunpack.c.l.b16 %v1867
    %v1904 = vunpack.c.l.b16 %v1868
    %v1905 = vunpack.c.l.b16 %v1869
    %v1906 = vunpack.c.l.b16 %v1870
    %v1907 = vunpack.c.l.b16 %v1871
    %v1908 = vunpack.c.l.b16 %v1872
    %v1909 = vunpack.c.l.b16 %v1873
    %v1910 = vunpack.c.l.b16 %v1874
    %v1911 = vunpack.c.l.b16 %v1875
    %v1912 = vunpack.c.l.b16 %v1876
    %v1913 = vunpack.c.l.b16 %v1877
    %v1914 = vunpack.c.l.b16 %v1878
    %v1915 = vunpack.c.l.b16 %v1879
    %v1916 = vpack.c.b16 %v1901, %v1900
    %v1917 = vpack.c.b16 %v1903, %v1902
    %v1918 = vpack.c.b16 %v1905, %v1904
    %v1919 = vpack.c.b16 %v1907, %v1906
    %v1920 = vpack.c.b16 %v1909, %v1908
    %v1921 = vpack.c.b16 %v1911, %v1910
    %v1922 = vpack.c.b16 %v1913, %v1912
    %v1923 = vpack.c.b16 %v1915, %v1914
    %1932 = vmatprep.subr.bf16.mxu0 0
    %1933 = vmatpush1.bf16.msra.mxu0 %v1916
    %1934 = vmatprep.subr.bf16.mxu0 0
    %1935 = vmatpush1.bf16.msra.mxu0 %v1917
    %1936 = vmatprep.subr.bf16.mxu0 0
    %1937 = vmatpush1.bf16.msra.mxu0 %v1918
    %1938 = vmatprep.subr.bf16.mxu0 0
    %1939 = vmatpush1.bf16.msra.mxu0 %v1919
    %1940 = vmatprep.subr.bf16.mxu0 0
    %1941 = vmatpush1.bf16.msra.mxu0 %v1920
    %1942 = vmatprep.subr.bf16.mxu0 0
    %1943 = vmatpush1.bf16.msra.mxu0 %v1921
    %1944 = vmatprep.subr.bf16.mxu0 0
    %1945 = vmatpush1.bf16.msra.mxu0 %v1922
    %1946 = vmatprep.subr.bf16.mxu0 0
    %1947 = vmatpush1.bf16.msra.mxu0 %v1923
    %1948 = vmatprep.subr.bf16.mxu0 0
    %1949 = vmatpush1.bf16.msra.mxu0 0
    %1950 = vmatprep.subr.bf16.mxu0 0
    %1951 = vmatpush1.bf16.msra.mxu0 0
    %1952 = vmatprep.subr.bf16.mxu0 0
    %1953 = vmatpush1.bf16.msra.mxu0 0
    %1954 = vmatprep.subr.bf16.mxu0 0
    %1955 = vmatpush1.bf16.msra.mxu0 0
    %1956 = vmatprep.subr.bf16.mxu0 0
    %1957 = vmatpush1.bf16.msra.mxu0 0
    %1958 = vmatprep.subr.bf16.mxu0 0
    %1959 = vmatpush1.bf16.msra.mxu0 0
    %1960 = vmatprep.subr.bf16.mxu0 0
    %1961 = vmatpush1.bf16.msra.mxu0 0
    %1962 = vmatprep.subr.bf16.mxu0 0
    %1963 = vmatpush1.bf16.msra.mxu0 0
    %1964 = vmatprep.mubr.bf16.mxu0 0
    %1965 = vmatmul.mubr.bf16.gmra.mrb[0].mxu0 %v1863
    %v1966 = vpop.f32.mrb[0].mxu0
    %v1967 = vadd.f32 %v1883, %v1966
    %v1968 = vpop.f32.mrb[0].mxu0
    %v1969 = vpop.f32.mrb[0].mxu0
    %v1970 = vpop.f32.mrb[0].mxu0
    %1971 = vdwg.mxu0
    %v1972 = vmax.f32 %v1967, 0.0
    %v1973 = vpack.c.bf16 %v1972, %v1972
    %v1974 = vld [vmem:[%s5] sm:$0xf]
    %v1975 = vld [vmem:[%s5 + $0x4] sm:$0xf]
    %v1976 = vld [vmem:[%s5 + $0x8] sm:$0xf]
    %v1977 = vld [vmem:[%s5 + $0xc] sm:$0xf]
    %v1978 = vld [vmem:[%s5 + $0x10] sm:$0xf]
    %v1979 = vld [vmem:[%s5 + $0x14] sm:$0xf]
    %v1980 = vld [vmem:[%s5 + $0x18] sm:$0xf]
    %v1981 = vld [vmem:[%s5 + $0x1c] sm:$0xf]
    %v1982 = vld [vmem:[%s5 + $0x20] sm:$0xf]
    %v1983 = vld [vmem:[%s5 + $0x24] sm:$0xf]
    %v1984 = vld [vmem:[%s5 + $0x28] sm:$0xf]
    %v1985 = vld [vmem:[%s5 + $0x2c] sm:$0xf]
    %v1986 = vld [vmem:[%s5 + $0x30] sm:$0xf]
    %v1987 = vld [vmem:[%s5 + $0x34] sm:$0xf]
    %v1988 = vld [vmem:[%s5 + $0x38] sm:$0xf]
    %v1989 = vld [vmem:[%s5 + $0x3c] sm:$0xf]
    %v1990 = vlaneseq
    %v1991 = vshrl.u32 %v1990, 7
    %v1992 = vsub.s32 0, %v1991
    %v1993 = vrot.slane %v33, %v1992
    %v2010 = vunpack.c.l.b16 %v1974
    %v2011 = vunpack.c.l.b16 %v1975
    %v2012 = vunpack.c.l.b16 %v1976
    %v2013 = vunpack.c.l.b16 %v1977
    %v2014 = vunpack.c.l.b16 %v1978
    %v2015 = vunpack.c.l.b16 %v1979
    %v2016 = vunpack.c.l.b16 %v1980
    %v2017 = vunpack.c.l.b16 %v1981
    %v2018 = vunpack.c.l.b16 %v1982
    %v2019 = vunpack.c.l.b16 %v1983
    %v2020 = vunpack.c.l.b16 %v1984
    %v2021 = vunpack.c.l.b16 %v1985
    %v2022 = vunpack.c.l.b16 %v1986
    %v2023 = vunpack.c.l.b16 %v1987
    %v2024 = vunpack.c.l.b16 %v1988
    %v2025 = vunpack.c.l.b16 %v1989
    %v2026 = vpack.c.b16 %v2011, %v2010
    %v2027 = vpack.c.b16 %v2013, %v2012
    %v2028 = vpack.c.b16 %v2015, %v2014
    %v2029 = vpack.c.b16 %v2017, %v2016
    %v2030 = vpack.c.b16 %v2019, %v2018
    %v2031 = vpack.c.b16 %v2021, %v2020
    %v2032 = vpack.c.b16 %v2023, %v2022
    %v2033 = vpack.c.b16 %v2025, %v2024
    %2042 = vmatprep.subr.bf16.mxu0 0
    %2043 = vmatpush1.bf16.msra.mxu0 %v2026
    %2044 = vmatprep.subr.bf16.mxu0 0
    %2045 = vmatpush1.bf16.msra.mxu0 %v2027
    %2046 = vmatprep.subr.bf16.mxu0 0
    %2047 = vmatpush1.bf16.msra.mxu0 %v2028
    %2048 = vmatprep.subr.bf16.mxu0 0
    %2049 = vmatpush1.bf16.msra.mxu0 %v2029
    %2050 = vmatprep.subr.bf16.mxu0 0
    %2051 = vmatpush1.bf16.msra.mxu0 %v2030
    %2052 = vmatprep.subr.bf16.mxu0 0
    %2053 = vmatpush1.bf16.msra.mxu0 %v2031
    %2054 = vmatprep.subr.bf16.mxu0 0
    %2055 = vmatpush1.bf16.msra.mxu0 %v2032
    %2056 = vmatprep.subr.bf16.mxu0 0
    %2057 = vmatpush1.bf16.msra.mxu0 %v2033
    %2058 = vmatprep.subr.bf16.mxu0 0
    %2059 = vmatpush1.bf16.msra.mxu0 0
    %2060 = vmatprep.subr.bf16.mxu0 0
    %2061 = vmatpush1.bf16.msra.mxu0 0
    %2062 = vmatprep.subr.bf16.mxu0 0
    %2063 = vmatpush1.bf16.msra.mxu0 0
    %2064 = vmatprep.subr.bf16.mxu0 0
    %2065 = vmatpush1.bf16.msra.mxu0 0
    %2066 = vmatprep.subr.bf16.mxu0 0
    %2067 = vmatpush1.bf16.msra.mxu0 0
    %2068 = vmatprep.subr.bf16.mxu0 0
    %2069 = vmatpush1.bf16.msra.mxu0 0
    %2070 = vmatprep.subr.bf16.mxu0 0
    %2071 = vmatpush1.bf16.msra.mxu0 0
    %2072 = vmatprep.subr.bf16.mxu0 0
    %2073 = vmatpush1.bf16.msra.mxu0 0
    %2074 = vmatprep.mubr.bf16.mxu0 0
    %2075 = vmatmul.mubr.bf16.gmra.mrb[0].mxu0 %v1973
    %v2076 = vpop.f32.mrb[0].mxu0
    %v2077 = vadd.f32 %v1993, %v2076
    %v2078 = vpop.f32.mrb[0].mxu0
    %v2079 = vpop.f32.mrb[0].mxu0
    %v2080 = vpop.f32.mrb[0].mxu0
    %2081 = vdwg.mxu0
    %2082 = vst [vmem:[#allocation5] sm:$0x3] %v2077
    // Predicated region
    $region30: #{basic_cnn_forward.1} parent=1 // pred_check
      _
    $region31: #{basic_cnn_forward.1} parent=1 // pred_check_branch
      %2084 = sbr.rel (0) target = $region33
    $region32: #{basic_cnn_forward.1} parent=1 // pred_region
      %s2086 = ssub.s32 32, 32
      %2087 = vsyncadd [#allocation6], %s2086
      %s2089 = sshll.u32 [#allocation5], 4
      %s2090 = int_to_ptr.vmem [resolvable:$true] %s2089
      %2092 = dma.vmem_to_hbm [thread:$0]  %s2090, 32, %s7, [#allocation6]
    $region33: #{basic_cnn_forward.1} parent=1 // pred_fallthru
      _
    // Predicated region
    $region34: #{basic_cnn_forward.1} parent=1 // pred_check
      _
    $region35: #{basic_cnn_forward.1} parent=1 // pred_check_branch
      %2094 = sbr.rel (0) target = $region37
    $region36: #{basic_cnn_forward.1} parent=1 // pred_region
      %2095 = dma.done [#allocation6], 32
    $region37: #{basic_cnn_forward.1} parent=1 // pred_fallthru
      _
    %2096 = vsyncpa [#allocation6], 1

</llo_original>
